<compile_context>
chip_gen: v6e
topology: v6e:2x2x1
jax: 0.10.0
libtpu: 0.0.40
codegen_flags: <defaults>
</compile_context>

<pallas_src>
import functools
import math

import jax
import jax.numpy as jnp
from jax.experimental import pallas as pl
from jax.experimental.pallas import tpu as pltpu

IN_FEATURES = 768
HIDDEN = 500
HIDDEN_PAD = 512          # 500 rounded up to a multiple of 128
LANE = 128                # minimum lane-dense output width
MAX_BATCH_TILE = 1024     # ~11 MiB double-buffered footprint; near-roofline
VMEM_LIMIT_BYTES = 48 << 20   # raise scoped VMEM (safe on v5e/v6e/v7x)


def _round_up(n, m):
    return ((n + m - 1) // m) * m


def _mlp_kernel(x_ref, w1_ref, b1_ref, w2_ref, b2_ref, out_ref):
    # x_ref:  (TB, 768)      f32    (streams per grid step; cast to bf16 here)
    # w1_ref: (768, 512)     bf16   b1_ref: (1, 512)    f32
    # w2_ref: (512, C_pad)   bf16   b2_ref: (1, C_pad)  f32
    # out_ref:(TB, C_pad)    f32
    x = x_ref[...].astype(jnp.bfloat16)
    h = jnp.dot(x, w1_ref[...], preferred_element_type=jnp.float32)
    h = jnp.maximum(h + b1_ref[...], 0.0)                 # f32 epilogue on VPU
    o = jnp.dot(h.astype(jnp.bfloat16), w2_ref[...],
                preferred_element_type=jnp.float32)
    out_ref[...] = (o + b2_ref[...]).astype(out_ref.dtype)


def prepare_params(w1, b1, w2, b2):
    """One-time weight prep: zero-pad to MXU/lane-aligned shapes, cast to bf16.

    Padding is exact: padded W/b entries are zero and ReLU(0) = 0, so padded
    hidden units / class columns contribute nothing.  Call once at load/init
    time, not per forward call.
    """
    num_classes = w2.shape[1]
    c_pad = _round_up(max(num_classes, LANE), LANE)

    w1p = jnp.zeros((IN_FEATURES, HIDDEN_PAD), jnp.bfloat16)
    w1p = w1p.at[:, :HIDDEN].set(w1.astype(jnp.bfloat16))
    b1p = jnp.zeros((1, HIDDEN_PAD), jnp.float32)
    b1p = b1p.at[:, :HIDDEN].set(b1.reshape(-1).astype(jnp.float32))
    w2p = jnp.zeros((HIDDEN_PAD, c_pad), jnp.bfloat16)
    w2p = w2p.at[:HIDDEN, :num_classes].set(w2.astype(jnp.bfloat16))
    b2p = jnp.zeros((1, c_pad), jnp.float32)
    b2p = b2p.at[:, :num_classes].set(b2.reshape(-1).astype(jnp.float32))
    return w1p, b1p, w2p, b2p, num_classes


@functools.partial(jax.jit, static_argnames=("num_classes",))
def mlp_classifier_forward(x, w1p, b1p, w2p, b2p, *, num_classes):
    """out = relu(x @ W1 + b1) @ W2 + b2, batch-tiled single Pallas kernel.

    x: (B, 768) f32.  w1p/b1p/w2p/b2p come from prepare_params().
    Returns (B, num_classes) float32.
    """
    batch, in_features = x.shape
    assert in_features == IN_FEATURES
    c_pad = w2p.shape[1]

    # Batch tiling: multiple of 16 rows (bf16 sublane packing), >= 2 grid
    # steps whenever the batch allows it (v7x dual-TensorCore sharding),
    # capped so double-buffered tiles stay comfortably inside VMEM.
    half = _round_up(pl.cdiv(batch, 2), 16)
    tb = min(MAX_BATCH_TILE, max(16, half))
    batch_pad = _round_up(batch, tb)

    # Only materialize a padded copy of x when the ragged tail requires it.
    if batch_pad != batch:
        x_in = jnp.pad(x, ((0, batch_pad - batch), (0, 0)))
    else:
        x_in = x

    grid = (batch_pad // tb,)
    flops = 2 * batch_pad * (IN_FEATURES * HIDDEN_PAD + HIDDEN_PAD * c_pad)
    bytes_accessed = (x_in.size * 4 + w1p.size * 2 + w2p.size * 2
                      + b1p.size * 4 + b2p.size * 4 + batch_pad * c_pad * 4)

    weights_resident = pl.Buffered(1)   # constant block index -> single buffer

    out = pl.pallas_call(
        _mlp_kernel,
        out_shape=jax.ShapeDtypeStruct((batch_pad, c_pad), jnp.float32),
        grid_spec=pltpu.PrefetchScalarGridSpec(
            num_scalar_prefetch=0,
            grid=grid,
            in_specs=[
                pl.BlockSpec((tb, IN_FEATURES), lambda i: (i, 0)),        # x
                pl.BlockSpec((IN_FEATURES, HIDDEN_PAD), lambda i: (0, 0),
                             pipeline_mode=weights_resident),             # w1
                pl.BlockSpec((1, HIDDEN_PAD), lambda i: (0, 0),
                             pipeline_mode=weights_resident),             # b1
                pl.BlockSpec((HIDDEN_PAD, c_pad), lambda i: (0, 0),
                             pipeline_mode=weights_resident),             # w2
                pl.BlockSpec((1, c_pad), lambda i: (0, 0),
                             pipeline_mode=weights_resident),             # b2
            ],
            out_specs=pl.BlockSpec((tb, c_pad), lambda i: (i, 0)),
        ),
        compiler_params=pltpu.CompilerParams(
            dimension_semantics=("parallel",),
            vmem_limit_bytes=VMEM_LIMIT_BYTES),
        cost_estimate=pl.CostEstimate(
            flops=flops, transcendentals=0, bytes_accessed=bytes_accessed),
    )(x_in, w1p, b1p, w2p, b2p)

    return out[:batch, :num_classes]


def init_params(key, in_features=IN_FEATURES, hidden=HIDDEN, num_classes=10,
                dtype=jnp.float32):
    """Kaiming-normal (nonlinearity='relu', fan_in) weights, zero biases.

    Weights stored as (in_features, out_features) == PyTorch weight.T.
    """
    k1, k2 = jax.random.split(key)
    w1 = (jax.random.normal(k1, (in_features, hidden), jnp.float32)
          * math.sqrt(2.0 / in_features)).astype(dtype)
    b1 = jnp.zeros((hidden,), dtype)
    w2 = (jax.random.normal(k2, (hidden, num_classes), jnp.float32)
          * math.sqrt(2.0 / hidden)).astype(dtype)
    b2 = jnp.zeros((num_classes,), dtype)
    return w1, b1, w2, b2


def reference_forward(x, w1, b1, w2, b2):
    """Pure-JAX reference with the same bf16 operands / f32 accumulation."""
    h = jnp.dot(x.astype(jnp.bfloat16), w1.astype(jnp.bfloat16),
                preferred_element_type=jnp.float32)
    h = jnp.maximum(h + b1.astype(jnp.float32), 0.0)
    o = jnp.dot(h.astype(jnp.bfloat16), w2.astype(jnp.bfloat16),
                preferred_element_type=jnp.float32)
    return o + b2.astype(jnp.float32)


if __name__ == "__main__":
    key = jax.random.PRNGKey(0)
    key_x, key_p = jax.random.split(key)

    batch = 2
    num_classes = 10

    x = jax.random.normal(key_x, (batch, IN_FEATURES), dtype=jnp.float32)
    w1, b1, w2, b2 = init_params(key_p, num_classes=num_classes)

    # One-time parameter prep (hoisted out of the forward path).
    w1p, b1p, w2p, b2p, nc = prepare_params(w1, b1, w2, b2)

    out = mlp_classifier_forward(x, w1p, b1p, w2p, b2p, num_classes=nc)
    out = jax.block_until_ready(out)
    assert out.shape == (batch, num_classes)

    ref = reference_forward(x, w1, b1, w2, b2)
    assert jnp.allclose(out, ref, atol=1e-2, rtol=1e-2), (
        "max abs diff = %f" % float(jnp.max(jnp.abs(out - ref))))

    print("KERNEL_OK")
</pallas_src>

<mosaic_0001>
module attributes {stable_mosaic.version = 11 : i64} {
  func.func @_mlp_kernel(%arg0: i32, %arg1: memref<16x768xf32, #tpu.memory_space<vmem>>, %arg2: memref<768x512xbf16, #tpu.memory_space<vmem>>, %arg3: memref<1x512xf32, #tpu.memory_space<vmem>>, %arg4: memref<512x128xbf16, #tpu.memory_space<vmem>>, %arg5: memref<1x128xf32, #tpu.memory_space<vmem>>, %arg6: memref<16x128xf32, #tpu.memory_space<vmem>>) attributes {dimension_semantics = [#tpu.dimension_semantics<parallel>], iteration_bounds = array<i64: 1>, scalar_prefetch = 0 : i64, scratch_operands = 0 : i64, tpu.core_type = #tpu.core_type<tc>, window_params = [{transform_indices = @transform_0, window_bounds = array<i64: 16, 768>}, {pipeline_mode = #tpu.pipeline_mode<synchronous>, transform_indices = @transform_1, window_bounds = array<i64: 768, 512>}, {pipeline_mode = #tpu.pipeline_mode<synchronous>, transform_indices = @transform_2, window_bounds = array<i64: 1, 512>}, {pipeline_mode = #tpu.pipeline_mode<synchronous>, transform_indices = @transform_3, window_bounds = array<i64: 512, 128>}, {pipeline_mode = #tpu.pipeline_mode<synchronous>, transform_indices = @transform_4, window_bounds = array<i64: 1, 128>}, {transform_indices = @transform_5, window_bounds = array<i64: 16, 128>}]} {
    %c0 = arith.constant 0 : index
    %c0_0 = arith.constant 0 : index
    %0 = vector.load %arg1[%c0, %c0_0] : memref<16x768xf32, #tpu.memory_space<vmem>>, vector<16x768xf32>
    %1 = arith.truncf %0 : vector<16x768xf32> to vector<16x768xbf16>
    %c0_1 = arith.constant 0 : index
    %c0_2 = arith.constant 0 : index
    %2 = vector.load %arg2[%c0_1, %c0_2] : memref<768x512xbf16, #tpu.memory_space<vmem>>, vector<768x512xbf16>
    %cst = arith.constant dense<0.000000e+00> : vector<16x512xf32>
    %3 = tpu.matmul %1, %2, %cst {dimension_numbers = #tpu.dot_dimension_numbers<[1], [0], [0], [1], [0, 0, 1, 1], [], []>} : vector<16x768xbf16>, vector<768x512xbf16>, vector<16x512xf32> -> vector<16x512xf32>
    %c0_3 = arith.constant 0 : index
    %c0_4 = arith.constant 0 : index
    %4 = vector.load %arg3[%c0_3, %c0_4] : memref<1x512xf32, #tpu.memory_space<vmem>>, vector<1x512xf32>
    %5 = vector.broadcast %4 : vector<1x512xf32> to vector<16x512xf32>
    %6 = arith.addf %3, %5 : vector<16x512xf32>
    %cst_5 = arith.constant 0.000000e+00 : f32
    %7 = vector.broadcast %cst_5 : f32 to vector<16x512xf32>
    %8 = arith.maximumf %6, %7 : vector<16x512xf32>
    %9 = arith.truncf %8 : vector<16x512xf32> to vector<16x512xbf16>
    %c0_6 = arith.constant 0 : index
    %c0_7 = arith.constant 0 : index
    %10 = vector.load %arg4[%c0_6, %c0_7] : memref<512x128xbf16, #tpu.memory_space<vmem>>, vector<512x128xbf16>
    %cst_8 = arith.constant dense<0.000000e+00> : vector<16x128xf32>
    %11 = tpu.matmul %9, %10, %cst_8 {dimension_numbers = #tpu.dot_dimension_numbers<[1], [0], [0], [1], [0, 0, 1, 1], [], []>} : vector<16x512xbf16>, vector<512x128xbf16>, vector<16x128xf32> -> vector<16x128xf32>
    %c0_9 = arith.constant 0 : index
    %c0_10 = arith.constant 0 : index
    %12 = vector.load %arg5[%c0_9, %c0_10] : memref<1x128xf32, #tpu.memory_space<vmem>>, vector<1x128xf32>
    %13 = vector.broadcast %12 : vector<1x128xf32> to vector<16x128xf32>
    %14 = arith.addf %11, %13 : vector<16x128xf32>
    %c0_11 = arith.constant 0 : index
    %c0_12 = arith.constant 0 : index
    %15 = vector.load %arg6[%c0_11, %c0_12] : memref<16x128xf32, #tpu.memory_space<vmem>>, vector<16x128xf32>
    tpu.vector_store %arg6[%c0_11, %c0_12], %14 {strides = array<i32>} : memref<16x128xf32, #tpu.memory_space<vmem>>, vector<16x128xf32>,
    return
  }
  func.func @transform_0(%arg0: i32) -> (i32, i32) {
    %c0_i32 = arith.constant 0 : i32
    %c0_i32_0 = arith.constant 0 : i32
    return %arg0, %c0_i32 : i32, i32
  }
  func.func @transform_1(%arg0: i32) -> (i32, i32) {
    %c0_i32 = arith.constant 0 : i32
    %c0_i32_0 = arith.constant 0 : i32
    %c0_i32_1 = arith.constant 0 : i32
    return %c0_i32, %c0_i32_0 : i32, i32
  }
  func.func @transform_2(%arg0: i32) -> (i32, i32) {
    %c0_i32 = arith.constant 0 : i32
    %c0_i32_0 = arith.constant 0 : i32
    %c0_i32_1 = arith.constant 0 : i32
    return %c0_i32, %c0_i32_0 : i32, i32
  }
  func.func @transform_3(%arg0: i32) -> (i32, i32) {
    %c0_i32 = arith.constant 0 : i32
    %c0_i32_0 = arith.constant 0 : i32
    %c0_i32_1 = arith.constant 0 : i32
    return %c0_i32, %c0_i32_0 : i32, i32
  }
  func.func @transform_4(%arg0: i32) -> (i32, i32) {
    %c0_i32 = arith.constant 0 : i32
    %c0_i32_0 = arith.constant 0 : i32
    %c0_i32_1 = arith.constant 0 : i32
    return %c0_i32, %c0_i32_0 : i32, i32
  }
  func.func @transform_5(%arg0: i32) -> (i32, i32) {
    %c0_i32 = arith.constant 0 : i32
    %c0_i32_0 = arith.constant 0 : i32
    return %arg0, %c0_i32 : i32, i32
  }
}

</mosaic_0001>

<llo_original>
// kernel: mlp_classifier_forward.1
$region0: #{mlp_classifier_forward.1}
  #allocation0 [shape = 'u32[]', space=smem, size = 0x4, offset = 0x4, fixed_abs, tag = 'smem constant byte address 0x4 - core index']
  #allocation1 [shape = 'u32[144,128]{1,0:T(1,128)}', space=vmem, size = 0x12000, scoped, tag = 'internal scratch']
  %s0 = inlined_call_operand.vmem [shape: f32[16,768], index: 0, kind: input, shape index: {}]
  %s1 = inlined_call_operand.hbm [shape: bf16[768,512], index: 1, kind: input, shape index: {}]
  %s2 = inlined_call_operand.vmem [shape: f32[1,512], index: 2, kind: input, shape index: {}]
  %s3 = inlined_call_operand.hbm [shape: bf16[512,128], index: 3, kind: input, shape index: {}]
  %s4 = inlined_call_operand.vmem [shape: f32[1,128], index: 4, kind: input, shape index: {}]
  %s5 = inlined_call_operand.vmem [shape: f32[16,128], index: 5, kind: output, shape index: {}]
  %s6 = sld [smem:[#allocation0]]
  $region38: #{mlp_classifier_forward.1} parent=0
    _
  %s8 = ssub.s32 1, %s6
  %s9 = scalar_select 0, %s8, %s6
  $region1: #{mlp_classifier_forward.1} parent=0
    #allocation2 [shape = 'u8[786432]{0}', space=vmem, size = 0xc0000, scoped, tag = 'input window, operand 1, single buffered']
    #allocation3 [shape = 's32[1]{0}', space=sflag, size = 0x4, scoped, tag = 'scoped memory for mlp_classifier_forward.1']
    #allocation4 [shape = 'u8[131072]{0}', space=vmem, size = 0x20000, scoped, tag = 'input window, operand 3, single buffered']
    #allocation5 [shape = 's32[1]{0}', space=sflag, size = 0x4, scoped, tag = 'scoped memory for mlp_classifier_forward.1']
    %10 = vsyncpa [#allocation3], 0
    %11 = vsyncpa [#allocation5], 0
    // Predicated region
    $region2: #{mlp_classifier_forward.1} parent=1 // pred_check
      _
    $region3: #{mlp_classifier_forward.1} parent=1 // pred_check_branch
      %13 = sbr.rel (0) target = $region5
    $region4: #{mlp_classifier_forward.1} parent=1 // pred_region
      _
    $region5: #{mlp_classifier_forward.1} parent=1 // pred_fallthru
      _
    // Predicated region
    $region6: #{mlp_classifier_forward.1} parent=1 // pred_check
      _
    $region7: #{mlp_classifier_forward.1} parent=1 // pred_check_branch
      %15 = sbr.rel (0) target = $region9
    $region8: #{mlp_classifier_forward.1} parent=1 // pred_region
      %s17 = ssub.s32 24576, 24576
      %18 = vsyncadd [#allocation3], %s17
      %s19 = sshll.u32 [#allocation2], 4
      %s20 = int_to_ptr.vmem [resolvable:$true] %s19
      %25 = dma.hbm_to_vmem [thread:$0]  %s1, 24576, %s20, [#allocation3], 256, 256, 16
    $region9: #{mlp_classifier_forward.1} parent=1 // pred_fallthru
      _
    // Predicated region
    $region10: #{mlp_classifier_forward.1} parent=1 // pred_check
      _
    $region11: #{mlp_classifier_forward.1} parent=1 // pred_check_branch
      %27 = sbr.rel (0) target = $region13
    $region12: #{mlp_classifier_forward.1} parent=1 // pred_region
      _
    $region13: #{mlp_classifier_forward.1} parent=1 // pred_fallthru
      _
    // Predicated region
    $region14: #{mlp_classifier_forward.1} parent=1 // pred_check
      _
    $region15: #{mlp_classifier_forward.1} parent=1 // pred_check_branch
      %29 = sbr.rel (0) target = $region17
    $region16: #{mlp_classifier_forward.1} parent=1 // pred_region
      %s31 = ssub.s32 4096, 4096
      %32 = vsyncadd [#allocation5], %s31
      %s33 = sshll.u32 [#allocation4], 4
      %s34 = int_to_ptr.vmem [resolvable:$true] %s33
      %39 = dma.hbm_to_vmem [thread:$0]  %s3, 4096, %s34, [#allocation5], 64, 64, 4
    $region17: #{mlp_classifier_forward.1} parent=1 // pred_fallthru
      _
    // Predicated region
    $region18: #{mlp_classifier_forward.1} parent=1 // pred_check
      _
    $region19: #{mlp_classifier_forward.1} parent=1 // pred_check_branch
      %41 = sbr.rel (0) target = $region21
    $region20: #{mlp_classifier_forward.1} parent=1 // pred_region
      _
    $region21: #{mlp_classifier_forward.1} parent=1 // pred_fallthru
      _
    // Predicated region
    $region22: #{mlp_classifier_forward.1} parent=1 // pred_check
      _
    $region23: #{mlp_classifier_forward.1} parent=1 // pred_check_branch
      %43 = sbr.rel (0) target = $region25
    $region24: #{mlp_classifier_forward.1} parent=1 // pred_region
      %44 = dma.done [#allocation3], 24576
    $region25: #{mlp_classifier_forward.1} parent=1 // pred_fallthru
      _
    // Predicated region
    $region26: #{mlp_classifier_forward.1} parent=1 // pred_check
      _
    $region27: #{mlp_classifier_forward.1} parent=1 // pred_check_branch
      %46 = sbr.rel (0) target = $region29
    $region28: #{mlp_classifier_forward.1} parent=1 // pred_region
      %47 = dma.done [#allocation5], 4096
    $region29: #{mlp_classifier_forward.1} parent=1 // pred_fallthru
      _
    %v49 = vld [vmem:[%s0] sm:$0xff]
    %v50 = vld [vmem:[%s0 + $0x8] sm:$0xff]
    %v51 = vld [vmem:[%s0 + $0x10] sm:$0xff]
    %v52 = vld [vmem:[%s0 + $0x18] sm:$0xff]
    %v53 = vld [vmem:[%s0 + $0x20] sm:$0xff]
    %v54 = vld [vmem:[%s0 + $0x28] sm:$0xff]
    %v55 = vld [vmem:[%s0 + $0x30] sm:$0xff]
    %v56 = vld [vmem:[%s0 + $0x38] sm:$0xff]
    %v57 = vld [vmem:[%s0 + $0x40] sm:$0xff]
    %v58 = vld [vmem:[%s0 + $0x48] sm:$0xff]
    %v59 = vld [vmem:[%s0 + $0x50] sm:$0xff]
    %v60 = vld [vmem:[%s0 + $0x58] sm:$0xff]
    %v61 = vpack.c.bf16 %v55, %v49
    %v62 = vpack.c.bf16 %v56, %v50
    %v63 = vpack.c.bf16 %v57, %v51
    %v64 = vpack.c.bf16 %v58, %v52
    %v65 = vpack.c.bf16 %v59, %v53
    %v66 = vpack.c.bf16 %v60, %v54
    %v67 = vld [vmem:[#allocation2] sm:$0xff]
    %v68 = vld [vmem:[#allocation2 + $0x8] sm:$0xff]
    %v69 = vld [vmem:[#allocation2 + $0x10] sm:$0xff]
    %v70 = vld [vmem:[#allocation2 + $0x18] sm:$0xff]
    %v71 = vld [vmem:[#allocation2 + $0x20] sm:$0xff]
    %v72 = vld [vmem:[#allocation2 + $0x28] sm:$0xff]
    %v73 = vld [vmem:[#allocation2 + $0x30] sm:$0xff]
    %v74 = vld [vmem:[#allocation2 + $0x38] sm:$0xff]
    %v75 = vld [vmem:[#allocation2 + $0x40] sm:$0xff]
    %v76 = vld [vmem:[#allocation2 + $0x48] sm:$0xff]
    %v77 = vld [vmem:[#allocation2 + $0x50] sm:$0xff]
    %v78 = vld [vmem:[#allocation2 + $0x58] sm:$0xff]
    %v79 = vld [vmem:[#allocation2 + $0x60] sm:$0xff]
    %v80 = vld [vmem:[#allocation2 + $0x68] sm:$0xff]
    %v81 = vld [vmem:[#allocation2 + $0x70] sm:$0xff]
    %v82 = vld [vmem:[#allocation2 + $0x78] sm:$0xff]
    %v83 = vld [vmem:[#allocation2 + $0x80] sm:$0xff]
    %v84 = vld [vmem:[#allocation2 + $0x88] sm:$0xff]
    %v85 = vld [vmem:[#allocation2 + $0x90] sm:$0xff]
    %v86 = vld [vmem:[#allocation2 + $0x98] sm:$0xff]
    %v87 = vld [vmem:[#allocation2 + $0xa0] sm:$0xff]
    %v88 = vld [vmem:[#allocation2 + $0xa8] sm:$0xff]
    %v89 = vld [vmem:[#allocation2 + $0xb0] sm:$0xff]
    %v90 = vld [vmem:[#allocation2 + $0xb8] sm:$0xff]
    %v91 = vld [vmem:[#allocation2 + $0xc0] sm:$0xff]
    %v92 = vld [vmem:[#allocation2 + $0xc8] sm:$0xff]
    %v93 = vld [vmem:[#allocation2 + $0xd0] sm:$0xff]
    %v94 = vld [vmem:[#allocation2 + $0xd8] sm:$0xff]
    %v95 = vld [vmem:[#allocation2 + $0xe0] sm:$0xff]
    %v96 = vld [vmem:[#allocation2 + $0xe8] sm:$0xff]
    %v97 = vld [vmem:[#allocation2 + $0xf0] sm:$0xff]
    %v98 = vld [vmem:[#allocation2 + $0xf8] sm:$0xff]
    %v99 = vld [vmem:[#allocation2 + $0x100] sm:$0xff]
    %v100 = vld [vmem:[#allocation2 + $0x108] sm:$0xff]
    %v101 = vld [vmem:[#allocation2 + $0x110] sm:$0xff]
    %v102 = vld [vmem:[#allocation2 + $0x118] sm:$0xff]
    %v103 = vld [vmem:[#allocation2 + $0x120] sm:$0xff]
    %v104 = vld [vmem:[#allocation2 + $0x128] sm:$0xff]
    %v105 = vld [vmem:[#allocation2 + $0x130] sm:$0xff]
    %v106 = vld [vmem:[#allocation2 + $0x138] sm:$0xff]
    %v107 = vld [vmem:[#allocation2 + $0x140] sm:$0xff]
    %v108 = vld [vmem:[#allocation2 + $0x148] sm:$0xff]
    %v109 = vld [vmem:[#allocation2 + $0x150] sm:$0xff]
    %v110 = vld [vmem:[#allocation2 + $0x158] sm:$0xff]
    %v111 = vld [vmem:[#allocation2 + $0x160] sm:$0xff]
    %v112 = vld [vmem:[#allocation2 + $0x168] sm:$0xff]
    %v113 = vld [vmem:[#allocation2 + $0x170] sm:$0xff]
    %v114 = vld [vmem:[#allocation2 + $0x178] sm:$0xff]
    %v115 = vld [vmem:[#allocation2 + $0x180] sm:$0xff]
    %v116 = vld [vmem:[#allocation2 + $0x188] sm:$0xff]
    %v117 = vld [vmem:[#allocation2 + $0x190] sm:$0xff]
    %v118 = vld [vmem:[#allocation2 + $0x198] sm:$0xff]
    %v119 = vld [vmem:[#allocation2 + $0x1a0] sm:$0xff]
    %v120 = vld [vmem:[#allocation2 + $0x1a8] sm:$0xff]
    %v121 = vld [vmem:[#allocation2 + $0x1b0] sm:$0xff]
    %v122 = vld [vmem:[#allocation2 + $0x1b8] sm:$0xff]
    %v123 = vld [vmem:[#allocation2 + $0x1c0] sm:$0xff]
    %v124 = vld [vmem:[#allocation2 + $0x1c8] sm:$0xff]
    %v125 = vld [vmem:[#allocation2 + $0x1d0] sm:$0xff]
    %v126 = vld [vmem:[#allocation2 + $0x1d8] sm:$0xff]
    %v127 = vld [vmem:[#allocation2 + $0x1e0] sm:$0xff]
    %v128 = vld [vmem:[#allocation2 + $0x1e8] sm:$0xff]
    %v129 = vld [vmem:[#allocation2 + $0x1f0] sm:$0xff]
    %v130 = vld [vmem:[#allocation2 + $0x1f8] sm:$0xff]
    %v131 = vld [vmem:[#allocation2 + $0x200] sm:$0xff]
    %v132 = vld [vmem:[#allocation2 + $0x208] sm:$0xff]
    %v133 = vld [vmem:[#allocation2 + $0x210] sm:$0xff]
    %v134 = vld [vmem:[#allocation2 + $0x218] sm:$0xff]
    %v135 = vld [vmem:[#allocation2 + $0x220] sm:$0xff]
    %v136 = vld [vmem:[#allocation2 + $0x228] sm:$0xff]
    %v137 = vld [vmem:[#allocation2 + $0x230] sm:$0xff]
    %v138 = vld [vmem:[#allocation2 + $0x238] sm:$0xff]
    %v139 = vld [vmem:[#allocation2 + $0x240] sm:$0xff]
    %v140 = vld [vmem:[#allocation2 + $0x248] sm:$0xff]
    %v141 = vld [vmem:[#allocation2 + $0x250] sm:$0xff]
    %v142 = vld [vmem:[#allocation2 + $0x258] sm:$0xff]
    %v143 = vld [vmem:[#allocation2 + $0x260] sm:$0xff]
    %v144 = vld [vmem:[#allocation2 + $0x268] sm:$0xff]
    %v145 = vld [vmem:[#allocation2 + $0x270] sm:$0xff]
    %v146 = vld [vmem:[#allocation2 + $0x278] sm:$0xff]
    %v147 = vld [vmem:[#allocation2 + $0x280] sm:$0xff]
    %v148 = vld [vmem:[#allocation2 + $0x288] sm:$0xff]
    %v149 = vld [vmem:[#allocation2 + $0x290] sm:$0xff]
    %v150 = vld [vmem:[#allocation2 + $0x298] sm:$0xff]
    %v151 = vld [vmem:[#allocation2 + $0x2a0] sm:$0xff]
    %v152 = vld [vmem:[#allocation2 + $0x2a8] sm:$0xff]
    %v153 = vld [vmem:[#allocation2 + $0x2b0] sm:$0xff]
    %v154 = vld [vmem:[#allocation2 + $0x2b8] sm:$0xff]
    %v155 = vld [vmem:[#allocation2 + $0x2c0] sm:$0xff]
    %v156 = vld [vmem:[#allocation2 + $0x2c8] sm:$0xff]
    %v157 = vld [vmem:[#allocation2 + $0x2d0] sm:$0xff]
    %v158 = vld [vmem:[#allocation2 + $0x2d8] sm:$0xff]
    %v159 = vld [vmem:[#allocation2 + $0x2e0] sm:$0xff]
    %v160 = vld [vmem:[#allocation2 + $0x2e8] sm:$0xff]
    %v161 = vld [vmem:[#allocation2 + $0x2f0] sm:$0xff]
    %v162 = vld [vmem:[#allocation2 + $0x2f8] sm:$0xff]
    %v163 = vld [vmem:[#allocation2 + $0x300] sm:$0xff]
    %v164 = vld [vmem:[#allocation2 + $0x308] sm:$0xff]
    %v165 = vld [vmem:[#allocation2 + $0x310] sm:$0xff]
    %v166 = vld [vmem:[#allocation2 + $0x318] sm:$0xff]
    %v167 = vld [vmem:[#allocation2 + $0x320] sm:$0xff]
    %v168 = vld [vmem:[#allocation2 + $0x328] sm:$0xff]
    %v169 = vld [vmem:[#allocation2 + $0x330] sm:$0xff]
    %v170 = vld [vmem:[#allocation2 + $0x338] sm:$0xff]
    %v171 = vld [vmem:[#allocation2 + $0x340] sm:$0xff]
    %v172 = vld [vmem:[#allocation2 + $0x348] sm:$0xff]
    %v173 = vld [vmem:[#allocation2 + $0x350] sm:$0xff]
    %v174 = vld [vmem:[#allocation2 + $0x358] sm:$0xff]
    %v175 = vld [vmem:[#allocation2 + $0x360] sm:$0xff]
    %v176 = vld [vmem:[#allocation2 + $0x368] sm:$0xff]
    %v177 = vld [vmem:[#allocation2 + $0x370] sm:$0xff]
    %v178 = vld [vmem:[#allocation2 + $0x378] sm:$0xff]
    %v179 = vld [vmem:[#allocation2 + $0x380] sm:$0xff]
    %v180 = vld [vmem:[#allocation2 + $0x388] sm:$0xff]
    %v181 = vld [vmem:[#allocation2 + $0x390] sm:$0xff]
    %v182 = vld [vmem:[#allocation2 + $0x398] sm:$0xff]
    %v183 = vld [vmem:[#allocation2 + $0x3a0] sm:$0xff]
    %v184 = vld [vmem:[#allocation2 + $0x3a8] sm:$0xff]
    %v185 = vld [vmem:[#allocation2 + $0x3b0] sm:$0xff]
    %v186 = vld [vmem:[#allocation2 + $0x3b8] sm:$0xff]
    %v187 = vld [vmem:[#allocation2 + $0x3c0] sm:$0xff]
    %v188 = vld [vmem:[#allocation2 + $0x3c8] sm:$0xff]
    %v189 = vld [vmem:[#allocation2 + $0x3d0] sm:$0xff]
    %v190 = vld [vmem:[#allocation2 + $0x3d8] sm:$0xff]
    %v191 = vld [vmem:[#allocation2 + $0x3e0] sm:$0xff]
    %v192 = vld [vmem:[#allocation2 + $0x3e8] sm:$0xff]
    %v193 = vld [vmem:[#allocation2 + $0x3f0] sm:$0xff]
    %v194 = vld [vmem:[#allocation2 + $0x3f8] sm:$0xff]
    %v195 = vld [vmem:[#allocation2 + $0x400] sm:$0xff]
    %v196 = vld [vmem:[#allocation2 + $0x408] sm:$0xff]
    %v197 = vld [vmem:[#allocation2 + $0x410] sm:$0xff]
    %v198 = vld [vmem:[#allocation2 + $0x418] sm:$0xff]
    %v199 = vld [vmem:[#allocation2 + $0x420] sm:$0xff]
    %v200 = vld [vmem:[#allocation2 + $0x428] sm:$0xff]
    %v201 = vld [vmem:[#allocation2 + $0x430] sm:$0xff]
    %v202 = vld [vmem:[#allocation2 + $0x438] sm:$0xff]
    %v203 = vld [vmem:[#allocation2 + $0x440] sm:$0xff]
    %v204 = vld [vmem:[#allocation2 + $0x448] sm:$0xff]
    %v205 = vld [vmem:[#allocation2 + $0x450] sm:$0xff]
    %v206 = vld [vmem:[#allocation2 + $0x458] sm:$0xff]
    %v207 = vld [vmem:[#allocation2 + $0x460] sm:$0xff]
    %v208 = vld [vmem:[#allocation2 + $0x468] sm:$0xff]
    %v209 = vld [vmem:[#allocation2 + $0x470] sm:$0xff]
    %v210 = vld [vmem:[#allocation2 + $0x478] sm:$0xff]
    %v211 = vld [vmem:[#allocation2 + $0x480] sm:$0xff]
    %v212 = vld [vmem:[#allocation2 + $0x488] sm:$0xff]
    %v213 = vld [vmem:[#allocation2 + $0x490] sm:$0xff]
    %v214 = vld [vmem:[#allocation2 + $0x498] sm:$0xff]
    %v215 = vld [vmem:[#allocation2 + $0x4a0] sm:$0xff]
    %v216 = vld [vmem:[#allocation2 + $0x4a8] sm:$0xff]
    %v217 = vld [vmem:[#allocation2 + $0x4b0] sm:$0xff]
    %v218 = vld [vmem:[#allocation2 + $0x4b8] sm:$0xff]
    %v219 = vld [vmem:[#allocation2 + $0x4c0] sm:$0xff]
    %v220 = vld [vmem:[#allocation2 + $0x4c8] sm:$0xff]
    %v221 = vld [vmem:[#allocation2 + $0x4d0] sm:$0xff]
    %v222 = vld [vmem:[#allocation2 + $0x4d8] sm:$0xff]
    %v223 = vld [vmem:[#allocation2 + $0x4e0] sm:$0xff]
    %v224 = vld [vmem:[#allocation2 + $0x4e8] sm:$0xff]
    %v225 = vld [vmem:[#allocation2 + $0x4f0] sm:$0xff]
    %v226 = vld [vmem:[#allocation2 + $0x4f8] sm:$0xff]
    %v227 = vld [vmem:[#allocation2 + $0x500] sm:$0xff]
    %v228 = vld [vmem:[#allocation2 + $0x508] sm:$0xff]
    %v229 = vld [vmem:[#allocation2 + $0x510] sm:$0xff]
    %v230 = vld [vmem:[#allocation2 + $0x518] sm:$0xff]
    %v231 = vld [vmem:[#allocation2 + $0x520] sm:$0xff]
    %v232 = vld [vmem:[#allocation2 + $0x528] sm:$0xff]
    %v233 = vld [vmem:[#allocation2 + $0x530] sm:$0xff]
    %v234 = vld [vmem:[#allocation2 + $0x538] sm:$0xff]
    %v235 = vld [vmem:[#allocation2 + $0x540] sm:$0xff]
    %v236 = vld [vmem:[#allocation2 + $0x548] sm:$0xff]
    %v237 = vld [vmem:[#allocation2 + $0x550] sm:$0xff]
    %v238 = vld [vmem:[#allocation2 + $0x558] sm:$0xff]
    %v239 = vld [vmem:[#allocation2 + $0x560] sm:$0xff]
    %v240 = vld [vmem:[#allocation2 + $0x568] sm:$0xff]
    %v241 = vld [vmem:[#allocation2 + $0x570] sm:$0xff]
    %v242 = vld [vmem:[#allocation2 + $0x578] sm:$0xff]
    %v243 = vld [vmem:[#allocation2 + $0x580] sm:$0xff]
    %v244 = vld [vmem:[#allocation2 + $0x588] sm:$0xff]
    %v245 = vld [vmem:[#allocation2 + $0x590] sm:$0xff]
    %v246 = vld [vmem:[#allocation2 + $0x598] sm:$0xff]
    %v247 = vld [vmem:[#allocation2 + $0x5a0] sm:$0xff]
    %v248 = vld [vmem:[#allocation2 + $0x5a8] sm:$0xff]
    %v249 = vld [vmem:[#allocation2 + $0x5b0] sm:$0xff]
    %v250 = vld [vmem:[#allocation2 + $0x5b8] sm:$0xff]
    %v251 = vld [vmem:[#allocation2 + $0x5c0] sm:$0xff]
    %v252 = vld [vmem:[#allocation2 + $0x5c8] sm:$0xff]
    %v253 = vld [vmem:[#allocation2 + $0x5d0] sm:$0xff]
    %v254 = vld [vmem:[#allocation2 + $0x5d8] sm:$0xff]
    %v255 = vld [vmem:[#allocation2 + $0x5e0] sm:$0xff]
    %v256 = vld [vmem:[#allocation2 + $0x5e8] sm:$0xff]
    %v257 = vld [vmem:[#allocation2 + $0x5f0] sm:$0xff]
    %v258 = vld [vmem:[#allocation2 + $0x5f8] sm:$0xff]
    %v259 = vld [vmem:[%s2] sm:$0xf]
    %v261 = vlaneseq
    %v262 = vshrl.u32 %v261, 7
    %v263 = vsub.s32 0, %v262
    %v264 = vrot.slane %v259, %v263
    %v265 = vlaneseq
    %v266 = vshrl.u32 %v265, 7
    %v267 = vsub.s32 1, %v266
    %v268 = vrot.slane %v259, %v267
    %v269 = vlaneseq
    %v270 = vshrl.u32 %v269, 7
    %v271 = vsub.s32 2, %v270
    %v272 = vrot.slane %v259, %v271
    %v273 = vlaneseq
    %v274 = vshrl.u32 %v273, 7
    %v275 = vsub.s32 3, %v274
    %v276 = vrot.slane %v259, %v275
    %v473 = vunpack.c.l.b16 %v67
    %v474 = vunpack.c.h.b16 %v67
    %v475 = vunpack.c.l.b16 %v68
    %v476 = vunpack.c.h.b16 %v68
    %v477 = vunpack.c.l.b16 %v69
    %v478 = vunpack.c.h.b16 %v69
    %v479 = vunpack.c.l.b16 %v70
    %v480 = vunpack.c.h.b16 %v70
    %v481 = vunpack.c.l.b16 %v71
    %v482 = vunpack.c.h.b16 %v71
    %v483 = vunpack.c.l.b16 %v72
    %v484 = vunpack.c.h.b16 %v72
    %v485 = vunpack.c.l.b16 %v73
    %v486 = vunpack.c.h.b16 %v73
    %v487 = vunpack.c.l.b16 %v74
    %v488 = vunpack.c.h.b16 %v74
    %v489 = vunpack.c.l.b16 %v75
    %v490 = vunpack.c.h.b16 %v75
    %v491 = vunpack.c.l.b16 %v76
    %v492 = vunpack.c.h.b16 %v76
    %v493 = vunpack.c.l.b16 %v77
    %v494 = vunpack.c.h.b16 %v77
    %v495 = vunpack.c.l.b16 %v78
    %v496 = vunpack.c.h.b16 %v78
    %v497 = vunpack.c.l.b16 %v79
    %v498 = vunpack.c.h.b16 %v79
    %v499 = vunpack.c.l.b16 %v80
    %v500 = vunpack.c.h.b16 %v80
    %v501 = vunpack.c.l.b16 %v81
    %v502 = vunpack.c.h.b16 %v81
    %v503 = vunpack.c.l.b16 %v82
    %v504 = vunpack.c.h.b16 %v82
    %v505 = vunpack.c.l.b16 %v83
    %v506 = vunpack.c.h.b16 %v83
    %v507 = vunpack.c.l.b16 %v84
    %v508 = vunpack.c.h.b16 %v84
    %v509 = vunpack.c.l.b16 %v85
    %v510 = vunpack.c.h.b16 %v85
    %v511 = vunpack.c.l.b16 %v86
    %v512 = vunpack.c.h.b16 %v86
    %v513 = vunpack.c.l.b16 %v87
    %v514 = vunpack.c.h.b16 %v87
    %v515 = vunpack.c.l.b16 %v88
    %v516 = vunpack.c.h.b16 %v88
    %v517 = vunpack.c.l.b16 %v89
    %v518 = vunpack.c.h.b16 %v89
    %v519 = vunpack.c.l.b16 %v90
    %v520 = vunpack.c.h.b16 %v90
    %v521 = vunpack.c.l.b16 %v91
    %v522 = vunpack.c.h.b16 %v91
    %v523 = vunpack.c.l.b16 %v92
    %v524 = vunpack.c.h.b16 %v92
    %v525 = vunpack.c.l.b16 %v93
    %v526 = vunpack.c.h.b16 %v93
    %v527 = vunpack.c.l.b16 %v94
    %v528 = vunpack.c.h.b16 %v94
    %v529 = vunpack.c.l.b16 %v95
    %v530 = vunpack.c.h.b16 %v95
    %v531 = vunpack.c.l.b16 %v96
    %v532 = vunpack.c.h.b16 %v96
    %v533 = vunpack.c.l.b16 %v97
    %v534 = vunpack.c.h.b16 %v97
    %v535 = vunpack.c.l.b16 %v98
    %v536 = vunpack.c.h.b16 %v98
    %v537 = vunpack.c.l.b16 %v99
    %v538 = vunpack.c.h.b16 %v99
    %v539 = vunpack.c.l.b16 %v100
    %v540 = vunpack.c.h.b16 %v100
    %v541 = vunpack.c.l.b16 %v101
    %v542 = vunpack.c.h.b16 %v101
    %v543 = vunpack.c.l.b16 %v102
    %v544 = vunpack.c.h.b16 %v102
    %v545 = vunpack.c.l.b16 %v103
    %v546 = vunpack.c.h.b16 %v103
    %v547 = vunpack.c.l.b16 %v104
    %v548 = vunpack.c.h.b16 %v104
    %v549 = vunpack.c.l.b16 %v105
    %v550 = vunpack.c.h.b16 %v105
    %v551 = vunpack.c.l.b16 %v106
    %v552 = vunpack.c.h.b16 %v106
    %v553 = vunpack.c.l.b16 %v107
    %v554 = vunpack.c.h.b16 %v107
    %v555 = vunpack.c.l.b16 %v108
    %v556 = vunpack.c.h.b16 %v108
    %v557 = vunpack.c.l.b16 %v109
    %v558 = vunpack.c.h.b16 %v109
    %v559 = vunpack.c.l.b16 %v110
    %v560 = vunpack.c.h.b16 %v110
    %v561 = vunpack.c.l.b16 %v111
    %v562 = vunpack.c.h.b16 %v111
    %v563 = vunpack.c.l.b16 %v112
    %v564 = vunpack.c.h.b16 %v112
    %v565 = vunpack.c.l.b16 %v113
    %v566 = vunpack.c.h.b16 %v113
    %v567 = vunpack.c.l.b16 %v114
    %v568 = vunpack.c.h.b16 %v114
    %v569 = vunpack.c.l.b16 %v115
    %v570 = vunpack.c.h.b16 %v115
    %v571 = vunpack.c.l.b16 %v116
    %v572 = vunpack.c.h.b16 %v116
    %v573 = vunpack.c.l.b16 %v117
    %v574 = vunpack.c.h.b16 %v117
    %v575 = vunpack.c.l.b16 %v118
    %v576 = vunpack.c.h.b16 %v118
    %v577 = vunpack.c.l.b16 %v119
    %v578 = vunpack.c.h.b16 %v119
    %v579 = vunpack.c.l.b16 %v120
    %v580 = vunpack.c.h.b16 %v120
    %v581 = vunpack.c.l.b16 %v121
    %v582 = vunpack.c.h.b16 %v121
    %v583 = vunpack.c.l.b16 %v122
    %v584 = vunpack.c.h.b16 %v122
    %v585 = vunpack.c.l.b16 %v123
    %v586 = vunpack.c.h.b16 %v123
    %v587 = vunpack.c.l.b16 %v124
    %v588 = vunpack.c.h.b16 %v124
    %v589 = vunpack.c.l.b16 %v125
    %v590 = vunpack.c.h.b16 %v125
    %v591 = vunpack.c.l.b16 %v126
    %v592 = vunpack.c.h.b16 %v126
    %v593 = vunpack.c.l.b16 %v127
    %v594 = vunpack.c.h.b16 %v127
    %v595 = vunpack.c.l.b16 %v128
    %v596 = vunpack.c.h.b16 %v128
    %v597 = vunpack.c.l.b16 %v129
    %v598 = vunpack.c.h.b16 %v129
    %v599 = vunpack.c.l.b16 %v130
    %v600 = vunpack.c.h.b16 %v130
    %v601 = vunpack.c.l.b16 %v131
    %v602 = vunpack.c.h.b16 %v131
    %v603 = vunpack.c.l.b16 %v132
    %v604 = vunpack.c.h.b16 %v132
    %v605 = vunpack.c.l.b16 %v133
    %v606 = vunpack.c.h.b16 %v133
    %v607 = vunpack.c.l.b16 %v134
    %v608 = vunpack.c.h.b16 %v134
    %v609 = vunpack.c.l.b16 %v135
    %v610 = vunpack.c.h.b16 %v135
    %v611 = vunpack.c.l.b16 %v136
    %v612 = vunpack.c.h.b16 %v136
    %v613 = vunpack.c.l.b16 %v137
    %v614 = vunpack.c.h.b16 %v137
    %v615 = vunpack.c.l.b16 %v138
    %v616 = vunpack.c.h.b16 %v138
    %v617 = vunpack.c.l.b16 %v139
    %v618 = vunpack.c.h.b16 %v139
    %v619 = vunpack.c.l.b16 %v140
    %v620 = vunpack.c.h.b16 %v140
    %v621 = vunpack.c.l.b16 %v141
    %v622 = vunpack.c.h.b16 %v141
    %v623 = vunpack.c.l.b16 %v142
    %v624 = vunpack.c.h.b16 %v142
    %v625 = vunpack.c.l.b16 %v143
    %v626 = vunpack.c.h.b16 %v143
    %v627 = vunpack.c.l.b16 %v144
    %v628 = vunpack.c.h.b16 %v144
    %v629 = vunpack.c.l.b16 %v145
    %v630 = vunpack.c.h.b16 %v145
    %v631 = vunpack.c.l.b16 %v146
    %v632 = vunpack.c.h.b16 %v146
    %v633 = vunpack.c.l.b16 %v147
    %v634 = vunpack.c.h.b16 %v147
    %v635 = vunpack.c.l.b16 %v148
    %v636 = vunpack.c.h.b16 %v148
    %v637 = vunpack.c.l.b16 %v149
    %v638 = vunpack.c.h.b16 %v149
    %v639 = vunpack.c.l.b16 %v150
    %v640 = vunpack.c.h.b16 %v150
    %v641 = vunpack.c.l.b16 %v151
    %v642 = vunpack.c.h.b16 %v151
    %v643 = vunpack.c.l.b16 %v152
    %v644 = vunpack.c.h.b16 %v152
    %v645 = vunpack.c.l.b16 %v153
    %v646 = vunpack.c.h.b16 %v153
    %v647 = vunpack.c.l.b16 %v154
    %v648 = vunpack.c.h.b16 %v154
    %v649 = vunpack.c.l.b16 %v155
    %v650 = vunpack.c.h.b16 %v155
    %v651 = vunpack.c.l.b16 %v156
    %v652 = vunpack.c.h.b16 %v156
    %v653 = vunpack.c.l.b16 %v157
    %v654 = vunpack.c.h.b16 %v157
    %v655 = vunpack.c.l.b16 %v158
    %v656 = vunpack.c.h.b16 %v158
    %v657 = vunpack.c.l.b16 %v159
    %v658 = vunpack.c.h.b16 %v159
    %v659 = vunpack.c.l.b16 %v160
    %v660 = vunpack.c.h.b16 %v160
    %v661 = vunpack.c.l.b16 %v161
    %v662 = vunpack.c.h.b16 %v161
    %v663 = vunpack.c.l.b16 %v162
    %v664 = vunpack.c.h.b16 %v162
    %v665 = vunpack.c.l.b16 %v163
    %v666 = vunpack.c.h.b16 %v163
    %v667 = vunpack.c.l.b16 %v164
    %v668 = vunpack.c.h.b16 %v164
    %v669 = vunpack.c.l.b16 %v165
    %v670 = vunpack.c.h.b16 %v165
    %v671 = vunpack.c.l.b16 %v166
    %v672 = vunpack.c.h.b16 %v166
    %v673 = vunpack.c.l.b16 %v167
    %v674 = vunpack.c.h.b16 %v167
    %v675 = vunpack.c.l.b16 %v168
    %v676 = vunpack.c.h.b16 %v168
    %v677 = vunpack.c.l.b16 %v169
    %v678 = vunpack.c.h.b16 %v169
    %v679 = vunpack.c.l.b16 %v170
    %v680 = vunpack.c.h.b16 %v170
    %v681 = vunpack.c.l.b16 %v171
    %v682 = vunpack.c.h.b16 %v171
    %v683 = vunpack.c.l.b16 %v172
    %v684 = vunpack.c.h.b16 %v172
    %v685 = vunpack.c.l.b16 %v173
    %v686 = vunpack.c.h.b16 %v173
    %v687 = vunpack.c.l.b16 %v174
    %v688 = vunpack.c.h.b16 %v174
    %v689 = vunpack.c.l.b16 %v175
    %v690 = vunpack.c.h.b16 %v175
    %v691 = vunpack.c.l.b16 %v176
    %v692 = vunpack.c.h.b16 %v176
    %v693 = vunpack.c.l.b16 %v177
    %v694 = vunpack.c.h.b16 %v177
    %v695 = vunpack.c.l.b16 %v178
    %v696 = vunpack.c.h.b16 %v178
    %v697 = vunpack.c.l.b16 %v179
    %v698 = vunpack.c.h.b16 %v179
    %v699 = vunpack.c.l.b16 %v180
    %v700 = vunpack.c.h.b16 %v180
    %v701 = vunpack.c.l.b16 %v181
    %v702 = vunpack.c.h.b16 %v181
    %v703 = vunpack.c.l.b16 %v182
    %v704 = vunpack.c.h.b16 %v182
    %v705 = vunpack.c.l.b16 %v183
    %v706 = vunpack.c.h.b16 %v183
    %v707 = vunpack.c.l.b16 %v184
    %v708 = vunpack.c.h.b16 %v184
    %v709 = vunpack.c.l.b16 %v185
    %v710 = vunpack.c.h.b16 %v185
    %v711 = vunpack.c.l.b16 %v186
    %v712 = vunpack.c.h.b16 %v186
    %v713 = vunpack.c.l.b16 %v187
    %v714 = vunpack.c.h.b16 %v187
    %v715 = vunpack.c.l.b16 %v188
    %v716 = vunpack.c.h.b16 %v188
    %v717 = vunpack.c.l.b16 %v189
    %v718 = vunpack.c.h.b16 %v189
    %v719 = vunpack.c.l.b16 %v190
    %v720 = vunpack.c.h.b16 %v190
    %v721 = vunpack.c.l.b16 %v191
    %v722 = vunpack.c.h.b16 %v191
    %v723 = vunpack.c.l.b16 %v192
    %v724 = vunpack.c.h.b16 %v192
    %v725 = vunpack.c.l.b16 %v193
    %v726 = vunpack.c.h.b16 %v193
    %v727 = vunpack.c.l.b16 %v194
    %v728 = vunpack.c.h.b16 %v194
    %v729 = vunpack.c.l.b16 %v195
    %v730 = vunpack.c.h.b16 %v195
    %v731 = vunpack.c.l.b16 %v196
    %v732 = vunpack.c.h.b16 %v196
    %v733 = vunpack.c.l.b16 %v197
    %v734 = vunpack.c.h.b16 %v197
    %v735 = vunpack.c.l.b16 %v198
    %v736 = vunpack.c.h.b16 %v198
    %v737 = vunpack.c.l.b16 %v199
    %v738 = vunpack.c.h.b16 %v199
    %v739 = vunpack.c.l.b16 %v200
    %v740 = vunpack.c.h.b16 %v200
    %v741 = vunpack.c.l.b16 %v201
    %v742 = vunpack.c.h.b16 %v201
    %v743 = vunpack.c.l.b16 %v202
    %v744 = vunpack.c.h.b16 %v202
    %v745 = vunpack.c.l.b16 %v203
    %v746 = vunpack.c.h.b16 %v203
    %v747 = vunpack.c.l.b16 %v204
    %v748 = vunpack.c.h.b16 %v204
    %v749 = vunpack.c.l.b16 %v205
    %v750 = vunpack.c.h.b16 %v205
    %v751 = vunpack.c.l.b16 %v206
    %v752 = vunpack.c.h.b16 %v206
    %v753 = vunpack.c.l.b16 %v207
    %v754 = vunpack.c.h.b16 %v207
    %v755 = vunpack.c.l.b16 %v208
    %v756 = vunpack.c.h.b16 %v208
    %v757 = vunpack.c.l.b16 %v209
    %v758 = vunpack.c.h.b16 %v209
    %v759 = vunpack.c.l.b16 %v210
    %v760 = vunpack.c.h.b16 %v210
    %v761 = vunpack.c.l.b16 %v211
    %v762 = vunpack.c.h.b16 %v211
    %v763 = vunpack.c.l.b16 %v212
    %v764 = vunpack.c.h.b16 %v212
    %v765 = vunpack.c.l.b16 %v213
    %v766 = vunpack.c.h.b16 %v213
    %v767 = vunpack.c.l.b16 %v214
    %v768 = vunpack.c.h.b16 %v214
    %v769 = vunpack.c.l.b16 %v215
    %v770 = vunpack.c.h.b16 %v215
    %v771 = vunpack.c.l.b16 %v216
    %v772 = vunpack.c.h.b16 %v216
    %v773 = vunpack.c.l.b16 %v217
    %v774 = vunpack.c.h.b16 %v217
    %v775 = vunpack.c.l.b16 %v218
    %v776 = vunpack.c.h.b16 %v218
    %v777 = vunpack.c.l.b16 %v219
    %v778 = vunpack.c.h.b16 %v219
    %v779 = vunpack.c.l.b16 %v220
    %v780 = vunpack.c.h.b16 %v220
    %v781 = vunpack.c.l.b16 %v221
    %v782 = vunpack.c.h.b16 %v221
    %v783 = vunpack.c.l.b16 %v222
    %v784 = vunpack.c.h.b16 %v222
    %v785 = vunpack.c.l.b16 %v223
    %v786 = vunpack.c.h.b16 %v223
    %v787 = vunpack.c.l.b16 %v224
    %v788 = vunpack.c.h.b16 %v224
    %v789 = vunpack.c.l.b16 %v225
    %v790 = vunpack.c.h.b16 %v225
    %v791 = vunpack.c.l.b16 %v226
    %v792 = vunpack.c.h.b16 %v226
    %v793 = vunpack.c.l.b16 %v227
    %v794 = vunpack.c.h.b16 %v227
    %v795 = vunpack.c.l.b16 %v228
    %v796 = vunpack.c.h.b16 %v228
    %v797 = vunpack.c.l.b16 %v229
    %v798 = vunpack.c.h.b16 %v229
    %v799 = vunpack.c.l.b16 %v230
    %v800 = vunpack.c.h.b16 %v230
    %v801 = vunpack.c.l.b16 %v231
    %v802 = vunpack.c.h.b16 %v231
    %v803 = vunpack.c.l.b16 %v232
    %v804 = vunpack.c.h.b16 %v232
    %v805 = vunpack.c.l.b16 %v233
    %v806 = vunpack.c.h.b16 %v233
    %v807 = vunpack.c.l.b16 %v234
    %v808 = vunpack.c.h.b16 %v234
    %v809 = vunpack.c.l.b16 %v235
    %v810 = vunpack.c.h.b16 %v235
    %v811 = vunpack.c.l.b16 %v236
    %v812 = vunpack.c.h.b16 %v236
    %v813 = vunpack.c.l.b16 %v237
    %v814 = vunpack.c.h.b16 %v237
    %v815 = vunpack.c.l.b16 %v238
    %v816 = vunpack.c.h.b16 %v238
    %v817 = vunpack.c.l.b16 %v239
    %v818 = vunpack.c.h.b16 %v239
    %v819 = vunpack.c.l.b16 %v240
    %v820 = vunpack.c.h.b16 %v240
    %v821 = vunpack.c.l.b16 %v241
    %v822 = vunpack.c.h.b16 %v241
    %v823 = vunpack.c.l.b16 %v242
    %v824 = vunpack.c.h.b16 %v242
    %v825 = vunpack.c.l.b16 %v243
    %v826 = vunpack.c.h.b16 %v243
    %v827 = vunpack.c.l.b16 %v244
    %v828 = vunpack.c.h.b16 %v244
    %v829 = vunpack.c.l.b16 %v245
    %v830 = vunpack.c.h.b16 %v245
    %v831 = vunpack.c.l.b16 %v246
    %v832 = vunpack.c.h.b16 %v246
    %v833 = vunpack.c.l.b16 %v247
    %v834 = vunpack.c.h.b16 %v247
    %v835 = vunpack.c.l.b16 %v248
    %v836 = vunpack.c.h.b16 %v248
    %v837 = vunpack.c.l.b16 %v249
    %v838 = vunpack.c.h.b16 %v249
    %v839 = vunpack.c.l.b16 %v250
    %v840 = vunpack.c.h.b16 %v250
    %v841 = vunpack.c.l.b16 %v251
    %v842 = vunpack.c.h.b16 %v251
    %v843 = vunpack.c.l.b16 %v252
    %v844 = vunpack.c.h.b16 %v252
    %v845 = vunpack.c.l.b16 %v253
    %v846 = vunpack.c.h.b16 %v253
    %v847 = vunpack.c.l.b16 %v254
    %v848 = vunpack.c.h.b16 %v254
    %v849 = vunpack.c.l.b16 %v255
    %v850 = vunpack.c.h.b16 %v255
    %v851 = vunpack.c.l.b16 %v256
    %v852 = vunpack.c.h.b16 %v256
    %v853 = vunpack.c.l.b16 %v257
    %v854 = vunpack.c.h.b16 %v257
    %v855 = vunpack.c.l.b16 %v258
    %v856 = vunpack.c.h.b16 %v258
    %v857 = vpack.c.b16 %v477, %v473
    %v858 = vpack.c.b16 %v478, %v474
    %v859 = vpack.c.b16 %v479, %v475
    %v860 = vpack.c.b16 %v480, %v476
    %v861 = vpack.c.b16 %v485, %v481
    %v862 = vpack.c.b16 %v486, %v482
    %v863 = vpack.c.b16 %v487, %v483
    %v864 = vpack.c.b16 %v488, %v484
    %v865 = vpack.c.b16 %v493, %v489
    %v866 = vpack.c.b16 %v494, %v490
    %v867 = vpack.c.b16 %v495, %v491
    %v868 = vpack.c.b16 %v496, %v492
    %v869 = vpack.c.b16 %v501, %v497
    %v870 = vpack.c.b16 %v502, %v498
    %v871 = vpack.c.b16 %v503, %v499
    %v872 = vpack.c.b16 %v504, %v500
    %v873 = vpack.c.b16 %v509, %v505
    %v874 = vpack.c.b16 %v510, %v506
    %v875 = vpack.c.b16 %v511, %v507
    %v876 = vpack.c.b16 %v512, %v508
    %v877 = vpack.c.b16 %v517, %v513
    %v878 = vpack.c.b16 %v518, %v514
    %v879 = vpack.c.b16 %v519, %v515
    %v880 = vpack.c.b16 %v520, %v516
    %v881 = vpack.c.b16 %v525, %v521
    %v882 = vpack.c.b16 %v526, %v522
    %v883 = vpack.c.b16 %v527, %v523
    %v884 = vpack.c.b16 %v528, %v524
    %v885 = vpack.c.b16 %v533, %v529
    %v886 = vpack.c.b16 %v534, %v530
    %v887 = vpack.c.b16 %v535, %v531
    %v888 = vpack.c.b16 %v536, %v532
    %v889 = vpack.c.b16 %v541, %v537
    %v890 = vpack.c.b16 %v542, %v538
    %v891 = vpack.c.b16 %v543, %v539
    %v892 = vpack.c.b16 %v544, %v540
    %v893 = vpack.c.b16 %v549, %v545
    %v894 = vpack.c.b16 %v550, %v546
    %v895 = vpack.c.b16 %v551, %v547
    %v896 = vpack.c.b16 %v552, %v548
    %v897 = vpack.c.b16 %v557, %v553
    %v898 = vpack.c.b16 %v558, %v554
    %v899 = vpack.c.b16 %v559, %v555
    %v900 = vpack.c.b16 %v560, %v556
    %v901 = vpack.c.b16 %v565, %v561
    %v902 = vpack.c.b16 %v566, %v562
    %v903 = vpack.c.b16 %v567, %v563
    %v904 = vpack.c.b16 %v568, %v564
    %v905 = vpack.c.b16 %v573, %v569
    %v906 = vpack.c.b16 %v574, %v570
    %v907 = vpack.c.b16 %v575, %v571
    %v908 = vpack.c.b16 %v576, %v572
    %v909 = vpack.c.b16 %v581, %v577
    %v910 = vpack.c.b16 %v582, %v578
    %v911 = vpack.c.b16 %v583, %v579
    %v912 = vpack.c.b16 %v584, %v580
    %v913 = vpack.c.b16 %v589, %v585
    %v914 = vpack.c.b16 %v590, %v586
    %v915 = vpack.c.b16 %v591, %v587
    %v916 = vpack.c.b16 %v592, %v588
    %v917 = vpack.c.b16 %v597, %v593
    %v918 = vpack.c.b16 %v598, %v594
    %v919 = vpack.c.b16 %v599, %v595
    %v920 = vpack.c.b16 %v600, %v596
    %v921 = vpack.c.b16 %v605, %v601
    %v922 = vpack.c.b16 %v606, %v602
    %v923 = vpack.c.b16 %v607, %v603
    %v924 = vpack.c.b16 %v608, %v604
    %v925 = vpack.c.b16 %v613, %v609
    %v926 = vpack.c.b16 %v614, %v610
    %v927 = vpack.c.b16 %v615, %v611
    %v928 = vpack.c.b16 %v616, %v612
    %v929 = vpack.c.b16 %v621, %v617
    %v930 = vpack.c.b16 %v622, %v618
    %v931 = vpack.c.b16 %v623, %v619
    %v932 = vpack.c.b16 %v624, %v620
    %v933 = vpack.c.b16 %v629, %v625
    %v934 = vpack.c.b16 %v630, %v626
    %v935 = vpack.c.b16 %v631, %v627
    %v936 = vpack.c.b16 %v632, %v628
    %v937 = vpack.c.b16 %v637, %v633
    %v938 = vpack.c.b16 %v638, %v634
    %v939 = vpack.c.b16 %v639, %v635
    %v940 = vpack.c.b16 %v640, %v636
    %v941 = vpack.c.b16 %v645, %v641
    %v942 = vpack.c.b16 %v646, %v642
    %v943 = vpack.c.b16 %v647, %v643
    %v944 = vpack.c.b16 %v648, %v644
    %v945 = vpack.c.b16 %v653, %v649
    %v946 = vpack.c.b16 %v654, %v650
    %v947 = vpack.c.b16 %v655, %v651
    %v948 = vpack.c.b16 %v656, %v652
    %v949 = vpack.c.b16 %v661, %v657
    %v950 = vpack.c.b16 %v662, %v658
    %v951 = vpack.c.b16 %v663, %v659
    %v952 = vpack.c.b16 %v664, %v660
    %v953 = vpack.c.b16 %v669, %v665
    %v954 = vpack.c.b16 %v670, %v666
    %v955 = vpack.c.b16 %v671, %v667
    %v956 = vpack.c.b16 %v672, %v668
    %v957 = vpack.c.b16 %v677, %v673
    %v958 = vpack.c.b16 %v678, %v674
    %v959 = vpack.c.b16 %v679, %v675
    %v960 = vpack.c.b16 %v680, %v676
    %v961 = vpack.c.b16 %v685, %v681
    %v962 = vpack.c.b16 %v686, %v682
    %v963 = vpack.c.b16 %v687, %v683
    %v964 = vpack.c.b16 %v688, %v684
    %v965 = vpack.c.b16 %v693, %v689
    %v966 = vpack.c.b16 %v694, %v690
    %v967 = vpack.c.b16 %v695, %v691
    %v968 = vpack.c.b16 %v696, %v692
    %v969 = vpack.c.b16 %v701, %v697
    %v970 = vpack.c.b16 %v702, %v698
    %v971 = vpack.c.b16 %v703, %v699
    %v972 = vpack.c.b16 %v704, %v700
    %v973 = vpack.c.b16 %v709, %v705
    %v974 = vpack.c.b16 %v710, %v706
    %v975 = vpack.c.b16 %v711, %v707
    %v976 = vpack.c.b16 %v712, %v708
    %v977 = vpack.c.b16 %v717, %v713
    %v978 = vpack.c.b16 %v718, %v714
    %v979 = vpack.c.b16 %v719, %v715
    %v980 = vpack.c.b16 %v720, %v716
    %v981 = vpack.c.b16 %v725, %v721
    %v982 = vpack.c.b16 %v726, %v722
    %v983 = vpack.c.b16 %v727, %v723
    %v984 = vpack.c.b16 %v728, %v724
    %v985 = vpack.c.b16 %v733, %v729
    %v986 = vpack.c.b16 %v734, %v730
    %v987 = vpack.c.b16 %v735, %v731
    %v988 = vpack.c.b16 %v736, %v732
    %v989 = vpack.c.b16 %v741, %v737
    %v990 = vpack.c.b16 %v742, %v738
    %v991 = vpack.c.b16 %v743, %v739
    %v992 = vpack.c.b16 %v744, %v740
    %v993 = vpack.c.b16 %v749, %v745
    %v994 = vpack.c.b16 %v750, %v746
    %v995 = vpack.c.b16 %v751, %v747
    %v996 = vpack.c.b16 %v752, %v748
    %v997 = vpack.c.b16 %v757, %v753
    %v998 = vpack.c.b16 %v758, %v754
    %v999 = vpack.c.b16 %v759, %v755
    %v1000 = vpack.c.b16 %v760, %v756
    %v1001 = vpack.c.b16 %v765, %v761
    %v1002 = vpack.c.b16 %v766, %v762
    %v1003 = vpack.c.b16 %v767, %v763
    %v1004 = vpack.c.b16 %v768, %v764
    %v1005 = vpack.c.b16 %v773, %v769
    %v1006 = vpack.c.b16 %v774, %v770
    %v1007 = vpack.c.b16 %v775, %v771
    %v1008 = vpack.c.b16 %v776, %v772
    %v1009 = vpack.c.b16 %v781, %v777
    %v1010 = vpack.c.b16 %v782, %v778
    %v1011 = vpack.c.b16 %v783, %v779
    %v1012 = vpack.c.b16 %v784, %v780
    %v1013 = vpack.c.b16 %v789, %v785
    %v1014 = vpack.c.b16 %v790, %v786
    %v1015 = vpack.c.b16 %v791, %v787
    %v1016 = vpack.c.b16 %v792, %v788
    %v1017 = vpack.c.b16 %v797, %v793
    %v1018 = vpack.c.b16 %v798, %v794
    %v1019 = vpack.c.b16 %v799, %v795
    %v1020 = vpack.c.b16 %v800, %v796
    %v1021 = vpack.c.b16 %v805, %v801
    %v1022 = vpack.c.b16 %v806, %v802
    %v1023 = vpack.c.b16 %v807, %v803
    %v1024 = vpack.c.b16 %v808, %v804
    %v1025 = vpack.c.b16 %v813, %v809
    %v1026 = vpack.c.b16 %v814, %v810
    %v1027 = vpack.c.b16 %v815, %v811
    %v1028 = vpack.c.b16 %v816, %v812
    %v1029 = vpack.c.b16 %v821, %v817
    %v1030 = vpack.c.b16 %v822, %v818
    %v1031 = vpack.c.b16 %v823, %v819
    %v1032 = vpack.c.b16 %v824, %v820
    %v1033 = vpack.c.b16 %v829, %v825
    %v1034 = vpack.c.b16 %v830, %v826
    %v1035 = vpack.c.b16 %v831, %v827
    %v1036 = vpack.c.b16 %v832, %v828
    %v1037 = vpack.c.b16 %v837, %v833
    %v1038 = vpack.c.b16 %v838, %v834
    %v1039 = vpack.c.b16 %v839, %v835
    %v1040 = vpack.c.b16 %v840, %v836
    %v1041 = vpack.c.b16 %v845, %v841
    %v1042 = vpack.c.b16 %v846, %v842
    %v1043 = vpack.c.b16 %v847, %v843
    %v1044 = vpack.c.b16 %v848, %v844
    %v1045 = vpack.c.b16 %v853, %v849
    %v1046 = vpack.c.b16 %v854, %v850
    %v1047 = vpack.c.b16 %v855, %v851
    %v1048 = vpack.c.b16 %v856, %v852
    %1241 = vmatprep.subr.bf16.mxu0 %v886
    %1242 = vmatpush1.bf16.msra.mxu0 %v885
    %1243 = vmatprep.subr.bf16.mxu0 %v882
    %1244 = vmatpush1.bf16.msra.mxu0 %v881
    %1245 = vmatprep.subr.bf16.mxu0 %v878
    %1246 = vmatpush1.bf16.msra.mxu0 %v877
    %1247 = vmatprep.subr.bf16.mxu0 %v874
    %1248 = vmatpush1.bf16.msra.mxu0 %v873
    %1249 = vmatprep.subr.bf16.mxu0 %v870
    %1250 = vmatpush1.bf16.msra.mxu0 %v869
    %1251 = vmatprep.subr.bf16.mxu0 %v866
    %1252 = vmatpush1.bf16.msra.mxu0 %v865
    %1253 = vmatprep.subr.bf16.mxu0 %v862
    %1254 = vmatpush1.bf16.msra.mxu0 %v861
    %1255 = vmatprep.subr.bf16.mxu0 %v858
    %1256 = vmatpush1.bf16.msra.mxu0 %v857
    %1257 = vmatprep.subr.bf16.mxu0 %v918
    %1258 = vmatpush2.bf16.msra.mxu0 %v917
    %1259 = vmatprep.subr.bf16.mxu0 %v914
    %1260 = vmatpush2.bf16.msra.mxu0 %v913
    %1261 = vmatprep.subr.bf16.mxu0 %v910
    %1262 = vmatpush2.bf16.msra.mxu0 %v909
    %1263 = vmatprep.subr.bf16.mxu0 %v906
    %1264 = vmatpush2.bf16.msra.mxu0 %v905
    %1265 = vmatprep.subr.bf16.mxu0 %v902
    %1266 = vmatpush2.bf16.msra.mxu0 %v901
    %1267 = vmatprep.subr.bf16.mxu0 %v898
    %1268 = vmatpush2.bf16.msra.mxu0 %v897
    %1269 = vmatprep.subr.bf16.mxu0 %v894
    %1270 = vmatpush2.bf16.msra.mxu0 %v893
    %1271 = vmatprep.subr.bf16.mxu0 %v890
    %1272 = vmatpush2.bf16.msra.mxu0 %v889
    %1273 = vmatprep.mubr.bf16.mxu0 %v62
    %1274 = vmatmul.mubr.bf16.gmra.mxu0 %v61
    %v1275 = vpop.f32.mrf.mxu0
    %v1276 = vadd.f32 %v264, %v1275
    %v1277 = vpop.f32.mrf.mxu0
    %v1278 = vadd.f32 %v268, %v1277
    %v1279 = vpop.f32.mrf.mxu0
    %v1280 = vadd.f32 %v264, %v1279
    %v1281 = vpop.f32.mrf.mxu0
    %v1282 = vadd.f32 %v268, %v1281
    %1283 = vdwg.mxu0
    %1284 = vmatprep.subr.bf16.mxu0 %v950
    %1285 = vmatpush1.bf16.msra.mxu0 %v949
    %1286 = vmatprep.subr.bf16.mxu0 %v946
    %1287 = vmatpush1.bf16.msra.mxu0 %v945
    %1288 = vmatprep.subr.bf16.mxu0 %v942
    %1289 = vmatpush1.bf16.msra.mxu0 %v941
    %1290 = vmatprep.subr.bf16.mxu0 %v938
    %1291 = vmatpush1.bf16.msra.mxu0 %v937
    %1292 = vmatprep.subr.bf16.mxu0 %v934
    %1293 = vmatpush1.bf16.msra.mxu0 %v933
    %1294 = vmatprep.subr.bf16.mxu0 %v930
    %1295 = vmatpush1.bf16.msra.mxu0 %v929
    %1296 = vmatprep.subr.bf16.mxu0 %v926
    %1297 = vmatpush1.bf16.msra.mxu0 %v925
    %1298 = vmatprep.subr.bf16.mxu0 %v922
    %1299 = vmatpush1.bf16.msra.mxu0 %v921
    %1300 = vmatprep.subr.bf16.mxu0 %v982
    %1301 = vmatpush2.bf16.msra.mxu0 %v981
    %1302 = vmatprep.subr.bf16.mxu0 %v978
    %1303 = vmatpush2.bf16.msra.mxu0 %v977
    %1304 = vmatprep.subr.bf16.mxu0 %v974
    %1305 = vmatpush2.bf16.msra.mxu0 %v973
    %1306 = vmatprep.subr.bf16.mxu0 %v970
    %1307 = vmatpush2.bf16.msra.mxu0 %v969
    %1308 = vmatprep.subr.bf16.mxu0 %v966
    %1309 = vmatpush2.bf16.msra.mxu0 %v965
    %1310 = vmatprep.subr.bf16.mxu0 %v962
    %1311 = vmatpush2.bf16.msra.mxu0 %v961
    %1312 = vmatprep.subr.bf16.mxu0 %v958
    %1313 = vmatpush2.bf16.msra.mxu0 %v957
    %1314 = vmatprep.subr.bf16.mxu0 %v954
    %1315 = vmatpush2.bf16.msra.mxu0 %v953
    %1316 = vmatprep.mubr.bf16.mxu0 %v64
    %1317 = vmatmul.mubr.bf16.gmra.mxu0 %v63
    %v1318 = vpop.f32.mrf.mxu0
    %v1319 = vadd.f32 %v1276, %v1318
    %v1320 = vpop.f32.mrf.mxu0
    %v1321 = vadd.f32 %v1278, %v1320
    %v1322 = vpop.f32.mrf.mxu0
    %v1323 = vadd.f32 %v1280, %v1322
    %v1324 = vpop.f32.mrf.mxu0
    %v1325 = vadd.f32 %v1282, %v1324
    %1326 = vdwg.mxu0
    %1327 = vmatprep.subr.bf16.mxu0 %v1014
    %1328 = vmatpush1.bf16.msra.mxu0 %v1013
    %1329 = vmatprep.subr.bf16.mxu0 %v1010
    %1330 = vmatpush1.bf16.msra.mxu0 %v1009
    %1331 = vmatprep.subr.bf16.mxu0 %v1006
    %1332 = vmatpush1.bf16.msra.mxu0 %v1005
    %1333 = vmatprep.subr.bf16.mxu0 %v1002
    %1334 = vmatpush1.bf16.msra.mxu0 %v1001
    %1335 = vmatprep.subr.bf16.mxu0 %v998
    %1336 = vmatpush1.bf16.msra.mxu0 %v997
    %1337 = vmatprep.subr.bf16.mxu0 %v994
    %1338 = vmatpush1.bf16.msra.mxu0 %v993
    %1339 = vmatprep.subr.bf16.mxu0 %v990
    %1340 = vmatpush1.bf16.msra.mxu0 %v989
    %1341 = vmatprep.subr.bf16.mxu0 %v986
    %1342 = vmatpush1.bf16.msra.mxu0 %v985
    %1343 = vmatprep.subr.bf16.mxu0 %v1046
    %1344 = vmatpush2.bf16.msra.mxu0 %v1045
    %1345 = vmatprep.subr.bf16.mxu0 %v1042
    %1346 = vmatpush2.bf16.msra.mxu0 %v1041
    %1347 = vmatprep.subr.bf16.mxu0 %v1038
    %1348 = vmatpush2.bf16.msra.mxu0 %v1037
    %1349 = vmatprep.subr.bf16.mxu0 %v1034
    %1350 = vmatpush2.bf16.msra.mxu0 %v1033
    %1351 = vmatprep.subr.bf16.mxu0 %v1030
    %1352 = vmatpush2.bf16.msra.mxu0 %v1029
    %1353 = vmatprep.subr.bf16.mxu0 %v1026
    %1354 = vmatpush2.bf16.msra.mxu0 %v1025
    %1355 = vmatprep.subr.bf16.mxu0 %v1022
    %1356 = vmatpush2.bf16.msra.mxu0 %v1021
    %1357 = vmatprep.subr.bf16.mxu0 %v1018
    %1358 = vmatpush2.bf16.msra.mxu0 %v1017
    %1359 = vmatprep.mubr.bf16.mxu0 %v66
    %1360 = vmatmul.mubr.bf16.gmra.mxu0 %v65
    %v1361 = vpop.f32.mrf.mxu0
    %v1362 = vadd.f32 %v1319, %v1361
    %v1363 = vpop.f32.mrf.mxu0
    %v1364 = vadd.f32 %v1321, %v1363
    %v1365 = vpop.f32.mrf.mxu0
    %v1366 = vadd.f32 %v1323, %v1365
    %v1367 = vpop.f32.mrf.mxu0
    %v1368 = vadd.f32 %v1325, %v1367
    %1369 = vdwg.mxu0
    %1370 = vmatprep.subr.bf16.mxu0 %v888
    %1371 = vmatpush1.bf16.msra.mxu0 %v887
    %1372 = vmatprep.subr.bf16.mxu0 %v884
    %1373 = vmatpush1.bf16.msra.mxu0 %v883
    %1374 = vmatprep.subr.bf16.mxu0 %v880
    %1375 = vmatpush1.bf16.msra.mxu0 %v879
    %1376 = vmatprep.subr.bf16.mxu0 %v876
    %1377 = vmatpush1.bf16.msra.mxu0 %v875
    %1378 = vmatprep.subr.bf16.mxu0 %v872
    %1379 = vmatpush1.bf16.msra.mxu0 %v871
    %1380 = vmatprep.subr.bf16.mxu0 %v868
    %1381 = vmatpush1.bf16.msra.mxu0 %v867
    %1382 = vmatprep.subr.bf16.mxu0 %v864
    %1383 = vmatpush1.bf16.msra.mxu0 %v863
    %1384 = vmatprep.subr.bf16.mxu0 %v860
    %1385 = vmatpush1.bf16.msra.mxu0 %v859
    %1386 = vmatprep.subr.bf16.mxu0 %v920
    %1387 = vmatpush2.bf16.msra.mxu0 %v919
    %1388 = vmatprep.subr.bf16.mxu0 %v916
    %1389 = vmatpush2.bf16.msra.mxu0 %v915
    %1390 = vmatprep.subr.bf16.mxu0 %v912
    %1391 = vmatpush2.bf16.msra.mxu0 %v911
    %1392 = vmatprep.subr.bf16.mxu0 %v908
    %1393 = vmatpush2.bf16.msra.mxu0 %v907
    %1394 = vmatprep.subr.bf16.mxu0 %v904
    %1395 = vmatpush2.bf16.msra.mxu0 %v903
    %1396 = vmatprep.subr.bf16.mxu0 %v900
    %1397 = vmatpush2.bf16.msra.mxu0 %v899
    %1398 = vmatprep.subr.bf16.mxu0 %v896
    %1399 = vmatpush2.bf16.msra.mxu0 %v895
    %1400 = vmatprep.subr.bf16.mxu0 %v892
    %1401 = vmatpush2.bf16.msra.mxu0 %v891
    %1402 = vmatprep.mubr.bf16.mxu0 %v62
    %1403 = vmatmul.mubr.bf16.gmra.mxu0 %v61
    %v1404 = vpop.f32.mrf.mxu0
    %v1405 = vadd.f32 %v272, %v1404
    %v1406 = vpop.f32.mrf.mxu0
    %v1407 = vadd.f32 %v276, %v1406
    %v1408 = vpop.f32.mrf.mxu0
    %v1409 = vadd.f32 %v272, %v1408
    %v1410 = vpop.f32.mrf.mxu0
    %v1411 = vadd.f32 %v276, %v1410
    %1412 = vdwg.mxu0
    %1413 = vmatprep.subr.bf16.mxu0 %v952
    %1414 = vmatpush1.bf16.msra.mxu0 %v951
    %1415 = vmatprep.subr.bf16.mxu0 %v948
    %1416 = vmatpush1.bf16.msra.mxu0 %v947
    %1417 = vmatprep.subr.bf16.mxu0 %v944
    %1418 = vmatpush1.bf16.msra.mxu0 %v943
    %1419 = vmatprep.subr.bf16.mxu0 %v940
    %1420 = vmatpush1.bf16.msra.mxu0 %v939
    %1421 = vmatprep.subr.bf16.mxu0 %v936
    %1422 = vmatpush1.bf16.msra.mxu0 %v935
    %1423 = vmatprep.subr.bf16.mxu0 %v932
    %1424 = vmatpush1.bf16.msra.mxu0 %v931
    %1425 = vmatprep.subr.bf16.mxu0 %v928
    %1426 = vmatpush1.bf16.msra.mxu0 %v927
    %1427 = vmatprep.subr.bf16.mxu0 %v924
    %1428 = vmatpush1.bf16.msra.mxu0 %v923
    %1429 = vmatprep.subr.bf16.mxu0 %v984
    %1430 = vmatpush2.bf16.msra.mxu0 %v983
    %1431 = vmatprep.subr.bf16.mxu0 %v980
    %1432 = vmatpush2.bf16.msra.mxu0 %v979
    %1433 = vmatprep.subr.bf16.mxu0 %v976
    %1434 = vmatpush2.bf16.msra.mxu0 %v975
    %1435 = vmatprep.subr.bf16.mxu0 %v972
    %1436 = vmatpush2.bf16.msra.mxu0 %v971
    %1437 = vmatprep.subr.bf16.mxu0 %v968
    %1438 = vmatpush2.bf16.msra.mxu0 %v967
    %1439 = vmatprep.subr.bf16.mxu0 %v964
    %1440 = vmatpush2.bf16.msra.mxu0 %v963
    %1441 = vmatprep.subr.bf16.mxu0 %v960
    %1442 = vmatpush2.bf16.msra.mxu0 %v959
    %1443 = vmatprep.subr.bf16.mxu0 %v956
    %1444 = vmatpush2.bf16.msra.mxu0 %v955
    %1445 = vmatprep.mubr.bf16.mxu0 %v64
    %1446 = vmatmul.mubr.bf16.gmra.mxu0 %v63
    %v1447 = vpop.f32.mrf.mxu0
    %v1448 = vadd.f32 %v1405, %v1447
    %v1449 = vpop.f32.mrf.mxu0
    %v1450 = vadd.f32 %v1407, %v1449
    %v1451 = vpop.f32.mrf.mxu0
    %v1452 = vadd.f32 %v1409, %v1451
    %v1453 = vpop.f32.mrf.mxu0
    %v1454 = vadd.f32 %v1411, %v1453
    %1455 = vdwg.mxu0
    %1456 = vmatprep.subr.bf16.mxu0 %v1016
    %1457 = vmatpush1.bf16.msra.mxu0 %v1015
    %1458 = vmatprep.subr.bf16.mxu0 %v1012
    %1459 = vmatpush1.bf16.msra.mxu0 %v1011
    %1460 = vmatprep.subr.bf16.mxu0 %v1008
    %1461 = vmatpush1.bf16.msra.mxu0 %v1007
    %1462 = vmatprep.subr.bf16.mxu0 %v1004
    %1463 = vmatpush1.bf16.msra.mxu0 %v1003
    %1464 = vmatprep.subr.bf16.mxu0 %v1000
    %1465 = vmatpush1.bf16.msra.mxu0 %v999
    %1466 = vmatprep.subr.bf16.mxu0 %v996
    %1467 = vmatpush1.bf16.msra.mxu0 %v995
    %1468 = vmatprep.subr.bf16.mxu0 %v992
    %1469 = vmatpush1.bf16.msra.mxu0 %v991
    %1470 = vmatprep.subr.bf16.mxu0 %v988
    %1471 = vmatpush1.bf16.msra.mxu0 %v987
    %1472 = vmatprep.subr.bf16.mxu0 %v1048
    %1473 = vmatpush2.bf16.msra.mxu0 %v1047
    %1474 = vmatprep.subr.bf16.mxu0 %v1044
    %1475 = vmatpush2.bf16.msra.mxu0 %v1043
    %1476 = vmatprep.subr.bf16.mxu0 %v1040
    %1477 = vmatpush2.bf16.msra.mxu0 %v1039
    %1478 = vmatprep.subr.bf16.mxu0 %v1036
    %1479 = vmatpush2.bf16.msra.mxu0 %v1035
    %1480 = vmatprep.subr.bf16.mxu0 %v1032
    %1481 = vmatpush2.bf16.msra.mxu0 %v1031
    %1482 = vmatprep.subr.bf16.mxu0 %v1028
    %1483 = vmatpush2.bf16.msra.mxu0 %v1027
    %1484 = vmatprep.subr.bf16.mxu0 %v1024
    %1485 = vmatpush2.bf16.msra.mxu0 %v1023
    %1486 = vmatprep.subr.bf16.mxu0 %v1020
    %1487 = vmatpush2.bf16.msra.mxu0 %v1019
    %1488 = vmatprep.mubr.bf16.mxu0 %v66
    %1489 = vmatmul.mubr.bf16.gmra.mxu0 %v65
    %v1490 = vpop.f32.mrf.mxu0
    %v1491 = vadd.f32 %v1448, %v1490
    %v1492 = vpop.f32.mrf.mxu0
    %v1493 = vadd.f32 %v1450, %v1492
    %v1494 = vpop.f32.mrf.mxu0
    %v1495 = vadd.f32 %v1452, %v1494
    %v1496 = vpop.f32.mrf.mxu0
    %v1497 = vadd.f32 %v1454, %v1496
    %1498 = vdwg.mxu0
    %v1499 = vmax.f32 %v1362, 0.0
    %v1500 = vmax.f32 %v1364, 0.0
    %v1501 = vmax.f32 %v1491, 0.0
    %v1502 = vmax.f32 %v1493, 0.0
    %v1503 = vmax.f32 %v1366, 0.0
    %v1504 = vmax.f32 %v1368, 0.0
    %v1505 = vmax.f32 %v1495, 0.0
    %v1506 = vmax.f32 %v1497, 0.0
    %v1507 = vpack.c.bf16 %v1503, %v1499
    %v1508 = vpack.c.bf16 %v1504, %v1500
    %v1509 = vpack.c.bf16 %v1505, %v1501
    %v1510 = vpack.c.bf16 %v1506, %v1502
    %v1511 = vld [vmem:[#allocation4] sm:$0xf]
    %v1512 = vld [vmem:[#allocation4 + $0x4] sm:$0xf]
    %v1513 = vld [vmem:[#allocation4 + $0x8] sm:$0xf]
    %v1514 = vld [vmem:[#allocation4 + $0xc] sm:$0xf]
    %v1515 = vld [vmem:[#allocation4 + $0x10] sm:$0xf]
    %v1516 = vld [vmem:[#allocation4 + $0x14] sm:$0xf]
    %v1517 = vld [vmem:[#allocation4 + $0x18] sm:$0xf]
    %v1518 = vld [vmem:[#allocation4 + $0x1c] sm:$0xf]
    %v1519 = vld [vmem:[#allocation4 + $0x20] sm:$0xf]
    %v1520 = vld [vmem:[#allocation4 + $0x24] sm:$0xf]
    %v1521 = vld [vmem:[#allocation4 + $0x28] sm:$0xf]
    %v1522 = vld [vmem:[#allocation4 + $0x2c] sm:$0xf]
    %v1523 = vld [vmem:[#allocation4 + $0x30] sm:$0xf]
    %v1524 = vld [vmem:[#allocation4 + $0x34] sm:$0xf]
    %v1525 = vld [vmem:[#allocation4 + $0x38] sm:$0xf]
    %v1526 = vld [vmem:[#allocation4 + $0x3c] sm:$0xf]
    %v1527 = vld [vmem:[#allocation4 + $0x40] sm:$0xf]
    %v1528 = vld [vmem:[#allocation4 + $0x44] sm:$0xf]
    %v1529 = vld [vmem:[#allocation4 + $0x48] sm:$0xf]
    %v1530 = vld [vmem:[#allocation4 + $0x4c] sm:$0xf]
    %v1531 = vld [vmem:[#allocation4 + $0x50] sm:$0xf]
    %v1532 = vld [vmem:[#allocation4 + $0x54] sm:$0xf]
    %v1533 = vld [vmem:[#allocation4 + $0x58] sm:$0xf]
    %v1534 = vld [vmem:[#allocation4 + $0x5c] sm:$0xf]
    %v1535 = vld [vmem:[#allocation4 + $0x60] sm:$0xf]
    %v1536 = vld [vmem:[#allocation4 + $0x64] sm:$0xf]
    %v1537 = vld [vmem:[#allocation4 + $0x68] sm:$0xf]
    %v1538 = vld [vmem:[#allocation4 + $0x6c] sm:$0xf]
    %v1539 = vld [vmem:[#allocation4 + $0x70] sm:$0xf]
    %v1540 = vld [vmem:[#allocation4 + $0x74] sm:$0xf]
    %v1541 = vld [vmem:[#allocation4 + $0x78] sm:$0xf]
    %v1542 = vld [vmem:[#allocation4 + $0x7c] sm:$0xf]
    %v1543 = vld [vmem:[#allocation4 + $0x80] sm:$0xf]
    %v1544 = vld [vmem:[#allocation4 + $0x84] sm:$0xf]
    %v1545 = vld [vmem:[#allocation4 + $0x88] sm:$0xf]
    %v1546 = vld [vmem:[#allocation4 + $0x8c] sm:$0xf]
    %v1547 = vld [vmem:[#allocation4 + $0x90] sm:$0xf]
    %v1548 = vld [vmem:[#allocation4 + $0x94] sm:$0xf]
    %v1549 = vld [vmem:[#allocation4 + $0x98] sm:$0xf]
    %v1550 = vld [vmem:[#allocation4 + $0x9c] sm:$0xf]
    %v1551 = vld [vmem:[#allocation4 + $0xa0] sm:$0xf]
    %v1552 = vld [vmem:[#allocation4 + $0xa4] sm:$0xf]
    %v1553 = vld [vmem:[#allocation4 + $0xa8] sm:$0xf]
    %v1554 = vld [vmem:[#allocation4 + $0xac] sm:$0xf]
    %v1555 = vld [vmem:[#allocation4 + $0xb0] sm:$0xf]
    %v1556 = vld [vmem:[#allocation4 + $0xb4] sm:$0xf]
    %v1557 = vld [vmem:[#allocation4 + $0xb8] sm:$0xf]
    %v1558 = vld [vmem:[#allocation4 + $0xbc] sm:$0xf]
    %v1559 = vld [vmem:[#allocation4 + $0xc0] sm:$0xf]
    %v1560 = vld [vmem:[#allocation4 + $0xc4] sm:$0xf]
    %v1561 = vld [vmem:[#allocation4 + $0xc8] sm:$0xf]
    %v1562 = vld [vmem:[#allocation4 + $0xcc] sm:$0xf]
    %v1563 = vld [vmem:[#allocation4 + $0xd0] sm:$0xf]
    %v1564 = vld [vmem:[#allocation4 + $0xd4] sm:$0xf]
    %v1565 = vld [vmem:[#allocation4 + $0xd8] sm:$0xf]
    %v1566 = vld [vmem:[#allocation4 + $0xdc] sm:$0xf]
    %v1567 = vld [vmem:[#allocation4 + $0xe0] sm:$0xf]
    %v1568 = vld [vmem:[#allocation4 + $0xe4] sm:$0xf]
    %v1569 = vld [vmem:[#allocation4 + $0xe8] sm:$0xf]
    %v1570 = vld [vmem:[#allocation4 + $0xec] sm:$0xf]
    %v1571 = vld [vmem:[#allocation4 + $0xf0] sm:$0xf]
    %v1572 = vld [vmem:[#allocation4 + $0xf4] sm:$0xf]
    %v1573 = vld [vmem:[#allocation4 + $0xf8] sm:$0xf]
    %v1574 = vld [vmem:[#allocation4 + $0xfc] sm:$0xf]
    %v1575 = vld [vmem:[%s4] sm:$0x1]
    %v1577 = vlaneseq
    %v1578 = vshrl.u32 %v1577, 7
    %v1579 = vsub.s32 0, %v1578
    %v1580 = vrot.slane %v1575, %v1579
    %v1646 = vunpack.c.l.b16 %v1511
    %v1647 = vunpack.c.l.b16 %v1512
    %v1648 = vunpack.c.l.b16 %v1513
    %v1649 = vunpack.c.l.b16 %v1514
    %v1650 = vunpack.c.l.b16 %v1515
    %v1651 = vunpack.c.l.b16 %v1516
    %v1652 = vunpack.c.l.b16 %v1517
    %v1653 = vunpack.c.l.b16 %v1518
    %v1654 = vunpack.c.l.b16 %v1519
    %v1655 = vunpack.c.l.b16 %v1520
    %v1656 = vunpack.c.l.b16 %v1521
    %v1657 = vunpack.c.l.b16 %v1522
    %v1658 = vunpack.c.l.b16 %v1523
    %v1659 = vunpack.c.l.b16 %v1524
    %v1660 = vunpack.c.l.b16 %v1525
    %v1661 = vunpack.c.l.b16 %v1526
    %v1662 = vunpack.c.l.b16 %v1527
    %v1663 = vunpack.c.l.b16 %v1528
    %v1664 = vunpack.c.l.b16 %v1529
    %v1665 = vunpack.c.l.b16 %v1530
    %v1666 = vunpack.c.l.b16 %v1531
    %v1667 = vunpack.c.l.b16 %v1532
    %v1668 = vunpack.c.l.b16 %v1533
    %v1669 = vunpack.c.l.b16 %v1534
    %v1670 = vunpack.c.l.b16 %v1535
    %v1671 = vunpack.c.l.b16 %v1536
    %v1672 = vunpack.c.l.b16 %v1537
    %v1673 = vunpack.c.l.b16 %v1538
    %v1674 = vunpack.c.l.b16 %v1539
    %v1675 = vunpack.c.l.b16 %v1540
    %v1676 = vunpack.c.l.b16 %v1541
    %v1677 = vunpack.c.l.b16 %v1542
    %v1678 = vunpack.c.l.b16 %v1543
    %v1679 = vunpack.c.l.b16 %v1544
    %v1680 = vunpack.c.l.b16 %v1545
    %v1681 = vunpack.c.l.b16 %v1546
    %v1682 = vunpack.c.l.b16 %v1547
    %v1683 = vunpack.c.l.b16 %v1548
    %v1684 = vunpack.c.l.b16 %v1549
    %v1685 = vunpack.c.l.b16 %v1550
    %v1686 = vunpack.c.l.b16 %v1551
    %v1687 = vunpack.c.l.b16 %v1552
    %v1688 = vunpack.c.l.b16 %v1553
    %v1689 = vunpack.c.l.b16 %v1554
    %v1690 = vunpack.c.l.b16 %v1555
    %v1691 = vunpack.c.l.b16 %v1556
    %v1692 = vunpack.c.l.b16 %v1557
    %v1693 = vunpack.c.l.b16 %v1558
    %v1694 = vunpack.c.l.b16 %v1559
    %v1695 = vunpack.c.l.b16 %v1560
    %v1696 = vunpack.c.l.b16 %v1561
    %v1697 = vunpack.c.l.b16 %v1562
    %v1698 = vunpack.c.l.b16 %v1563
    %v1699 = vunpack.c.l.b16 %v1564
    %v1700 = vunpack.c.l.b16 %v1565
    %v1701 = vunpack.c.l.b16 %v1566
    %v1702 = vunpack.c.l.b16 %v1567
    %v1703 = vunpack.c.l.b16 %v1568
    %v1704 = vunpack.c.l.b16 %v1569
    %v1705 = vunpack.c.l.b16 %v1570
    %v1706 = vunpack.c.l.b16 %v1571
    %v1707 = vunpack.c.l.b16 %v1572
    %v1708 = vunpack.c.l.b16 %v1573
    %v1709 = vunpack.c.l.b16 %v1574
    %v1710 = vpack.c.b16 %v1647, %v1646
    %v1711 = vpack.c.b16 %v1649, %v1648
    %v1712 = vpack.c.b16 %v1651, %v1650
    %v1713 = vpack.c.b16 %v1653, %v1652
    %v1714 = vpack.c.b16 %v1655, %v1654
    %v1715 = vpack.c.b16 %v1657, %v1656
    %v1716 = vpack.c.b16 %v1659, %v1658
    %v1717 = vpack.c.b16 %v1661, %v1660
    %v1718 = vpack.c.b16 %v1663, %v1662
    %v1719 = vpack.c.b16 %v1665, %v1664
    %v1720 = vpack.c.b16 %v1667, %v1666
    %v1721 = vpack.c.b16 %v1669, %v1668
    %v1722 = vpack.c.b16 %v1671, %v1670
    %v1723 = vpack.c.b16 %v1673, %v1672
    %v1724 = vpack.c.b16 %v1675, %v1674
    %v1725 = vpack.c.b16 %v1677, %v1676
    %v1726 = vpack.c.b16 %v1679, %v1678
    %v1727 = vpack.c.b16 %v1681, %v1680
    %v1728 = vpack.c.b16 %v1683, %v1682
    %v1729 = vpack.c.b16 %v1685, %v1684
    %v1730 = vpack.c.b16 %v1687, %v1686
    %v1731 = vpack.c.b16 %v1689, %v1688
    %v1732 = vpack.c.b16 %v1691, %v1690
    %v1733 = vpack.c.b16 %v1693, %v1692
    %v1734 = vpack.c.b16 %v1695, %v1694
    %v1735 = vpack.c.b16 %v1697, %v1696
    %v1736 = vpack.c.b16 %v1699, %v1698
    %v1737 = vpack.c.b16 %v1701, %v1700
    %v1738 = vpack.c.b16 %v1703, %v1702
    %v1739 = vpack.c.b16 %v1705, %v1704
    %v1740 = vpack.c.b16 %v1707, %v1706
    %v1741 = vpack.c.b16 %v1709, %v1708
    %1774 = vmatprep.subr.bf16.mxu0 0
    %1775 = vmatpush1.bf16.msra.mxu0 %v1717
    %1776 = vmatprep.subr.bf16.mxu0 0
    %1777 = vmatpush1.bf16.msra.mxu0 %v1716
    %1778 = vmatprep.subr.bf16.mxu0 0
    %1779 = vmatpush1.bf16.msra.mxu0 %v1715
    %1780 = vmatprep.subr.bf16.mxu0 0
    %1781 = vmatpush1.bf16.msra.mxu0 %v1714
    %1782 = vmatprep.subr.bf16.mxu0 0
    %1783 = vmatpush1.bf16.msra.mxu0 %v1713
    %1784 = vmatprep.subr.bf16.mxu0 0
    %1785 = vmatpush1.bf16.msra.mxu0 %v1712
    %1786 = vmatprep.subr.bf16.mxu0 0
    %1787 = vmatpush1.bf16.msra.mxu0 %v1711
    %1788 = vmatprep.subr.bf16.mxu0 0
    %1789 = vmatpush1.bf16.msra.mxu0 %v1710
    %1790 = vmatprep.subr.bf16.mxu0 0
    %1791 = vmatpush2.bf16.msra.mxu0 %v1725
    %1792 = vmatprep.subr.bf16.mxu0 0
    %1793 = vmatpush2.bf16.msra.mxu0 %v1724
    %1794 = vmatprep.subr.bf16.mxu0 0
    %1795 = vmatpush2.bf16.msra.mxu0 %v1723
    %1796 = vmatprep.subr.bf16.mxu0 0
    %1797 = vmatpush2.bf16.msra.mxu0 %v1722
    %1798 = vmatprep.subr.bf16.mxu0 0
    %1799 = vmatpush2.bf16.msra.mxu0 %v1721
    %1800 = vmatprep.subr.bf16.mxu0 0
    %1801 = vmatpush2.bf16.msra.mxu0 %v1720
    %1802 = vmatprep.subr.bf16.mxu0 0
    %1803 = vmatpush2.bf16.msra.mxu0 %v1719
    %1804 = vmatprep.subr.bf16.mxu0 0
    %1805 = vmatpush2.bf16.msra.mxu0 %v1718
    %1806 = vmatprep.mubr.bf16.mxu0 %v1508
    %1807 = vmatmul.mubr.bf16.gmra.mxu0 %v1507
    %v1808 = vpop.f32.mrf.mxu0
    %v1809 = vadd.f32 %v1580, %v1808
    %v1810 = vpop.f32.mrf.mxu0
    %v1811 = vpop.f32.mrf.mxu0
    %v1812 = vadd.f32 %v1580, %v1811
    %v1813 = vpop.f32.mrf.mxu0
    %1814 = vdwg.mxu0
    %1815 = vmatprep.subr.bf16.mxu0 0
    %1816 = vmatpush1.bf16.msra.mxu0 %v1733
    %1817 = vmatprep.subr.bf16.mxu0 0
    %1818 = vmatpush1.bf16.msra.mxu0 %v1732
    %1819 = vmatprep.subr.bf16.mxu0 0
    %1820 = vmatpush1.bf16.msra.mxu0 %v1731
    %1821 = vmatprep.subr.bf16.mxu0 0
    %1822 = vmatpush1.bf16.msra.mxu0 %v1730
    %1823 = vmatprep.subr.bf16.mxu0 0
    %1824 = vmatpush1.bf16.msra.mxu0 %v1729
    %1825 = vmatprep.subr.bf16.mxu0 0
    %1826 = vmatpush1.bf16.msra.mxu0 %v1728
    %1827 = vmatprep.subr.bf16.mxu0 0
    %1828 = vmatpush1.bf16.msra.mxu0 %v1727
    %1829 = vmatprep.subr.bf16.mxu0 0
    %1830 = vmatpush1.bf16.msra.mxu0 %v1726
    %1831 = vmatprep.subr.bf16.mxu0 0
    %1832 = vmatpush2.bf16.msra.mxu0 %v1741
    %1833 = vmatprep.subr.bf16.mxu0 0
    %1834 = vmatpush2.bf16.msra.mxu0 %v1740
    %1835 = vmatprep.subr.bf16.mxu0 0
    %1836 = vmatpush2.bf16.msra.mxu0 %v1739
    %1837 = vmatprep.subr.bf16.mxu0 0
    %1838 = vmatpush2.bf16.msra.mxu0 %v1738
    %1839 = vmatprep.subr.bf16.mxu0 0
    %1840 = vmatpush2.bf16.msra.mxu0 %v1737
    %1841 = vmatprep.subr.bf16.mxu0 0
    %1842 = vmatpush2.bf16.msra.mxu0 %v1736
    %1843 = vmatprep.subr.bf16.mxu0 0
    %1844 = vmatpush2.bf16.msra.mxu0 %v1735
    %1845 = vmatprep.subr.bf16.mxu0 0
    %1846 = vmatpush2.bf16.msra.mxu0 %v1734
    %1847 = vmatprep.mubr.bf16.mxu0 %v1510
    %1848 = vmatmul.mubr.bf16.gmra.mxu0 %v1509
    %v1849 = vpop.f32.mrf.mxu0
    %v1850 = vadd.f32 %v1809, %v1849
    %v1851 = vpop.f32.mrf.mxu0
    %v1852 = vpop.f32.mrf.mxu0
    %v1853 = vadd.f32 %v1812, %v1852
    %v1854 = vpop.f32.mrf.mxu0
    %1855 = vdwg.mxu0
    %1856 = vst [vmem:[%s5] sm:$0xff] %v1850
    %1857 = vst [vmem:[%s5 + $0x8] sm:$0xff] %v1853
    // Predicated region
    $region30: #{mlp_classifier_forward.1} parent=1 // pred_check
      _
    $region31: #{mlp_classifier_forward.1} parent=1 // pred_check_branch
      %1859 = sbr.rel (0) target = $region33
    $region32: #{mlp_classifier_forward.1} parent=1 // pred_region
      _
    $region33: #{mlp_classifier_forward.1} parent=1 // pred_fallthru
      _
    // Predicated region
    $region34: #{mlp_classifier_forward.1} parent=1 // pred_check
      _
    $region35: #{mlp_classifier_forward.1} parent=1 // pred_check_branch
      %1861 = sbr.rel (0) target = $region37
    $region36: #{mlp_classifier_forward.1} parent=1 // pred_region
      _
    $region37: #{mlp_classifier_forward.1} parent=1 // pred_fallthru
      _
    %1862 = vsyncpa [#allocation3], 1
    %1863 = vsyncpa [#allocation5], 1

</llo_original>
